<compile_context>
chip_gen: v7x
topology: tpu7x:2x2x1
jax: 0.10.0
libtpu: 0.0.40
codegen_flags: <defaults>
</compile_context>

<pallas_src>
import numpy as np

import jax
import jax.numpy as jnp
from jax import lax
from jax.experimental import pallas as pl
from jax.experimental.pallas import tpu as pltpu


def _leaky_relu(x, negative_slope=0.01):
    # PyTorch F.leaky_relu default negative_slope=0.01
    return jnp.where(x >= 0, x, negative_slope * x)


# --------------------------- Pallas kernel ---------------------------------

def ngcf_layer_kernel(nblk_ref, blkid_ref,                      # scalar prefetch (SMEM)
                      adj_ref, ego_k_ref, ego_row_ref, w_ref, b_ref,   # inputs
                      ego_out_ref, norm_out_ref,                # outputs
                      side_acc):                                # VMEM scratch
    i = pl.program_id(0)
    k = pl.program_id(1)
    nk = pl.num_programs(1)

    @pl.when(k == 0)
    def _():
        side_acc[...] = jnp.zeros_like(side_acc)

    # Accumulate the SpMM row tile only over valid (nonzero) column blocks.
    @pl.when(k < nblk_ref[i])
    def _():
        side_acc[...] += jnp.dot(
            adj_ref[...],                               # bf16 (tm, tk)
            ego_k_ref[...].astype(jnp.bfloat16),        # bf16 (tk, Dp)
            preferred_element_type=jnp.float32)

    # Epilogue: everything after the SpMM runs once, on the last k step.
    @pl.when(k == nk - 1)
    def _():
        dp = ego_out_ref.shape[1]
        side = side_acc[...]                            # (tm, Dp) f32
        bi = ego_row_ref[...] * side                    # (tm, Dp) f32

        # Fused GC/Bi projection: one (tm, 2Dp) @ (2Dp, 2Dp) matmul against the
        # block-diagonal combined weight.  leaky_relu is elementwise, so it can
        # be applied to the concatenated result before splitting.
        sb = jnp.concatenate([side, bi], axis=-1)
        h = _leaky_relu(
            jnp.dot(sb, w_ref[...], preferred_element_type=jnp.float32)
            + b_ref[...])
        ego_new = h[:, :dp] + h[:, dp:]
        # TODO(synk): nn.Dropout is stochastic in train mode; eval-mode identity here.

        # F.normalize(p=2, dim=1): x / max(||x||, 1e-12) == x * rsqrt(max(||x||^2, 1e-24))
        sumsq = jnp.sum(ego_new * ego_new, axis=1, keepdims=True)
        norm = ego_new * lax.rsqrt(jnp.maximum(sumsq, 1e-24))

        ego_out_ref[...] = ego_new
        norm_out_ref[...] = norm


# ------------------------ block-sparse schedule -----------------------------

def build_block_schedule(adj_np, tm, tk):
    """Per row tile, the compressed list of column blocks that have any nonzero."""
    N = adj_np.shape[0]
    ni, nk = N // tm, N // tk
    nz = adj_np.reshape(ni, tm, nk, tk).any(axis=(1, 3))        # [ni, nk] bool
    counts = nz.sum(axis=1).astype(np.int32)
    max_blk = max(int(counts.max()), 1)
    blkid = np.zeros((ni, max_blk), dtype=np.int32)
    for i in range(ni):
        ids = np.nonzero(nz[i])[0].astype(np.int32)
        if ids.size == 0:
            continue                                            # counts[i] == 0
        blkid[i, :ids.size] = ids
        blkid[i, ids.size:] = ids[-1]     # repeat last id -> no extra DMA issued
    # flatten (SMEM 2-D arrays pad to [*,128]); index as blk[i*max_blk + k]
    return jnp.asarray(counts), jnp.asarray(blkid.reshape(-1)), max_blk


# ----------------------------- layer wrapper --------------------------------

def ngcf_layer(adj_bf16, ego, w_comb, b_comb, nblk, blkid_flat, max_blk, *, tm, tk):
    """One NGCF propagation layer on lane-padded (Dp-wide) features."""
    N, dp = ego.shape
    assert N % tm == 0 and N % tk == 0
    grid = (N // tm, max_blk)

    adj_map = lambda i, k, cnt, blk: (i, blk[i * max_blk + k])
    ego_k_map = lambda i, k, cnt, blk: (blk[i * max_blk + k], 0)
    row_map = lambda i, k, cnt, blk: (i, 0)
    const_map = lambda i, k, cnt, blk: (0, 0)

    out_shape = (jax.ShapeDtypeStruct((N, dp), jnp.float32),
                 jax.ShapeDtypeStruct((N, dp), jnp.float32))

    return pl.pallas_call(
        ngcf_layer_kernel,
        out_shape=out_shape,
        grid_spec=pltpu.PrefetchScalarGridSpec(
            num_scalar_prefetch=2,
            grid=grid,
            in_specs=[
                pl.BlockSpec((tm, tk), adj_map),            # adj block (bf16)
                pl.BlockSpec((tk, dp), ego_k_map),          # ego K-block (SpMM rhs)
                pl.BlockSpec((tm, dp), row_map),            # ego row tile (for bi)
                pl.BlockSpec((2 * dp, 2 * dp), const_map),  # block-diag [Wgc, Wbi]
                pl.BlockSpec((1, 2 * dp), const_map),       # concat bias
            ],
            out_specs=[
                pl.BlockSpec((tm, dp), row_map),            # ego'
                pl.BlockSpec((tm, dp), row_map),            # normalized ego'
            ],
            scratch_shapes=[pltpu.VMEM((tm, dp), jnp.float32)],
        ),
        compiler_params=pltpu.CompilerParams(
            dimension_semantics=("parallel", "arbitrary")),
    )(nblk, blkid_flat, adj_bf16, ego, ego, w_comb, b_comb)


# ---------------- parameter construction (plain JAX glue) -------------------

def xavier_uniform(key, shape):
    fan_out, fan_in = shape                 # torch xavier on (rows, cols)
    limit = (6.0 / (fan_in + fan_out)) ** 0.5
    return jax.random.uniform(key, shape, jnp.float32, -limit, limit)


def kaiming_linear(key, in_dim, out_dim):
    # nn.Linear default init: U(-1/sqrt(in), 1/sqrt(in)) for both W and b.
    kw, kb = jax.random.split(key)
    bound = 1.0 / (in_dim ** 0.5)
    w = jax.random.uniform(kw, (out_dim, in_dim), jnp.float32, -bound, bound)
    b = jax.random.uniform(kb, (out_dim,), jnp.float32, -bound, bound)
    return w, b


def build_ngcf_params(key, n_users, n_items, embedding_dim, weight_size):
    keys = jax.random.split(key, 2 + 2 * len(weight_size))
    user_emb = xavier_uniform(keys[0], (n_users, embedding_dim))
    item_emb = xavier_uniform(keys[1], (n_items, embedding_dim))
    dims = [embedding_dim] + list(weight_size)
    gc, bi = [], []
    for i in range(len(weight_size)):
        gc.append(kaiming_linear(keys[2 + 2 * i], dims[i], dims[i + 1]))
        bi.append(kaiming_linear(keys[3 + 2 * i], dims[i], dims[i + 1]))
    return user_emb, item_emb, gc, bi


def _pad2d(x, rows, cols):
    return jnp.pad(x, ((0, rows - x.shape[0]), (0, cols - x.shape[1])))


def ngcf_forward(adj, user_emb, item_emb, gc_params, bi_params,
                 n_users, n_items, *, d_pad=128, tm=128, tk=128):
    N = n_users + n_items
    ego0 = jnp.concatenate([user_emb, item_emb], axis=0)          # [N, D0] f32
    layer_dims = [ego0.shape[1]] + [w.shape[0] for (w, _) in gc_params]
    assert max(layer_dims) <= d_pad

    # adjacency streamed as bf16 (f32 accumulation in-kernel); block schedule
    # computed once on the host (static graph preprocessing, like CSR packing).
    adj_bf16 = adj.astype(jnp.bfloat16)
    nblk, blkid_flat, max_blk = build_block_schedule(np.asarray(adj), tm, tk)

    ego_p = _pad2d(ego0, N, d_pad)                                # lane-dense features
    all_embeddings = [ego0]
    for (wg, bg), (wb, bb) in zip(gc_params, bi_params):
        d_out = wg.shape[0]
        # pre-transpose to [in, out] and zero-pad to [Dp, Dp]; build block-diag
        wg_p = _pad2d(wg.T, d_pad, d_pad)
        wb_p = _pad2d(wb.T, d_pad, d_pad)
        zeros = jnp.zeros((d_pad, d_pad), jnp.float32)
        w_comb = jnp.concatenate(
            [jnp.concatenate([wg_p, zeros], axis=1),
             jnp.concatenate([zeros, wb_p], axis=1)], axis=0)     # [2Dp, 2Dp]
        b_comb = jnp.concatenate(
            [_pad2d(bg[None, :], 1, d_pad), _pad2d(bb[None, :], 1, d_pad)],
            axis=1)                                               # [1, 2Dp]

        ego_p, norm_p = ngcf_layer(adj_bf16, ego_p, w_comb, b_comb,
                                   nblk, blkid_flat, max_blk, tm=tm, tk=tk)
        all_embeddings.append(norm_p[:, :d_out])

    all_embeddings = jnp.concatenate(all_embeddings, axis=1)
    return all_embeddings[:n_users], all_embeddings[n_users:]


# ------------------------- pure-JAX reference --------------------------------

def ngcf_reference(adj, user_emb, item_emb, gc_params, bi_params, n_users):
    ego = jnp.concatenate([user_emb, item_emb], axis=0)
    outs = [ego]
    for (wg, bg), (wb, bb) in zip(gc_params, bi_params):
        side = adj @ ego
        s = jax.nn.leaky_relu(side @ wg.T + bg, 0.01)
        b = jax.nn.leaky_relu((ego * side) @ wb.T + bb, 0.01)
        ego = s + b
        nrm = jnp.sqrt(jnp.sum(ego * ego, axis=1, keepdims=True))
        outs.append(ego / jnp.maximum(nrm, 1e-12))
    all_e = jnp.concatenate(outs, axis=1)
    return all_e[:n_users], all_e[n_users:]


if __name__ == "__main__":
    n_users, n_items = 96, 160          # N = 256
    embedding_dim = 32
    weight_size = [32, 32]              # 2 layers
    N = n_users + n_items

    key = jax.random.PRNGKey(0)
    k_adj, k_params = jax.random.split(key)

    # deterministic synthetic (dense) normalized adjacency
    adj_raw = (jax.random.uniform(k_adj, (N, N)) < 0.05).astype(jnp.float32)
    adj_raw = adj_raw + adj_raw.T
    deg = jnp.maximum(adj_raw.sum(axis=1, keepdims=True), 1.0)
    adj = adj_raw / deg

    user_emb, item_emb, gc_params, bi_params = build_ngcf_params(
        k_params, n_users, n_items, embedding_dim, weight_size)

    u_g, i_g = ngcf_forward(adj, user_emb, item_emb, gc_params, bi_params,
                            n_users, n_items, d_pad=128, tm=128, tk=128)
    jax.block_until_ready((u_g, i_g))

    expected_dim = embedding_dim + sum(weight_size)
    assert u_g.shape == (n_users, expected_dim), u_g.shape
    assert i_g.shape == (n_items, expected_dim), i_g.shape

    # Compare against the f32 pure-JAX reference (loose tolerance covers the
    # bf16 adjacency stream).
    u_ref, i_ref = ngcf_reference(adj, user_emb, item_emb,
                                  gc_params, bi_params, n_users)
    np.testing.assert_allclose(np.asarray(u_g), np.asarray(u_ref),
                               atol=3e-2, rtol=2e-1)
    np.testing.assert_allclose(np.asarray(i_g), np.asarray(i_ref),
                               atol=3e-2, rtol=2e-1)

    print("KERNEL_OK")
</pallas_src>

<mosaic_0001>
module attributes {stable_mosaic.version = 11 : i64} {
  func.func @ngcf_layer_kernel(%arg0: i32, %arg1: i32, %arg2: memref<2xi32, #tpu.memory_space<smem>>, %arg3: memref<4xi32, #tpu.memory_space<smem>>, %arg4: memref<128x128xbf16, #tpu.memory_space<vmem>>, %arg5: memref<128x128xf32, #tpu.memory_space<vmem>>, %arg6: memref<128x128xf32, #tpu.memory_space<vmem>>, %arg7: memref<256x256xf32, #tpu.memory_space<vmem>>, %arg8: memref<1x256xf32, #tpu.memory_space<vmem>>, %arg9: memref<128x128xf32, #tpu.memory_space<vmem>>, %arg10: memref<128x128xf32, #tpu.memory_space<vmem>>, %arg11: memref<128x128xf32, #tpu.memory_space<vmem>>) attributes {dimension_semantics = [#tpu.dimension_semantics<parallel>, #tpu.dimension_semantics<arbitrary>], iteration_bounds = array<i64: 2, 2>, scalar_prefetch = 2 : i64, scratch_operands = 1 : i64, tpu.core_type = #tpu.core_type<tc>, window_params = [{transform_indices = @transform_0, window_bounds = array<i64: 128, 128>}, {transform_indices = @transform_1, window_bounds = array<i64: 128, 128>}, {transform_indices = @transform_2, window_bounds = array<i64: 128, 128>}, {pipeline_mode = #tpu.pipeline_mode<synchronous>, transform_indices = @transform_3, window_bounds = array<i64: 256, 256>}, {pipeline_mode = #tpu.pipeline_mode<synchronous>, transform_indices = @transform_4, window_bounds = array<i64: 1, 256>}, {transform_indices = @transform_5, window_bounds = array<i64: 128, 128>}, {transform_indices = @transform_6, window_bounds = array<i64: 128, 128>}]} {
    %c0_i32 = arith.constant 0 : i32
    %0 = arith.cmpi eq, %arg1, %c0_i32 : i32
    %1 = arith.extui %0 : i1 to i32
    %c0_i32_0 = arith.constant 0 : i32
    %2 = arith.cmpi ne, %1, %c0_i32_0 : i32
    scf.if %2 {
      %cst = arith.constant 0.000000e+00 : f32
      %11 = vector.broadcast %cst : f32 to vector<128x128xf32>
      %c0 = arith.constant 0 : index
      %c0_3 = arith.constant 0 : index
      %12 = vector.load %arg11[%c0, %c0_3] : memref<128x128xf32, #tpu.memory_space<vmem>>, vector<128x128xf32>
      tpu.vector_store %arg11[%c0, %c0_3], %11 {strides = array<i32>} : memref<128x128xf32, #tpu.memory_space<vmem>>, vector<128x128xf32>,
    } else {
    }
    %3 = arith.index_cast %arg0 : i32 to index
    %4 = memref.load %arg2[%3] : memref<2xi32, #tpu.memory_space<smem>>
    %5 = arith.cmpi slt, %arg1, %4 : i32
    %6 = arith.extui %5 : i1 to i32
    %c0_i32_1 = arith.constant 0 : i32
    %7 = arith.cmpi ne, %6, %c0_i32_1 : i32
    scf.if %7 {
      %c0 = arith.constant 0 : index
      %c0_3 = arith.constant 0 : index
      %11 = vector.load %arg11[%c0, %c0_3] : memref<128x128xf32, #tpu.memory_space<vmem>>, vector<128x128xf32>
      %c0_4 = arith.constant 0 : index
      %c0_5 = arith.constant 0 : index
      %12 = vector.load %arg4[%c0_4, %c0_5] : memref<128x128xbf16, #tpu.memory_space<vmem>>, vector<128x128xbf16>
      %c0_6 = arith.constant 0 : index
      %c0_7 = arith.constant 0 : index
      %13 = vector.load %arg5[%c0_6, %c0_7] : memref<128x128xf32, #tpu.memory_space<vmem>>, vector<128x128xf32>
      %14 = arith.truncf %13 : vector<128x128xf32> to vector<128x128xbf16>
      %cst = arith.constant dense<0.000000e+00> : vector<128x128xf32>
      %15 = tpu.matmul %12, %14, %cst {dimension_numbers = #tpu.dot_dimension_numbers<[1], [0], [0], [1], [0, 0, 1, 1], [], []>} : vector<128x128xbf16>, vector<128x128xbf16>, vector<128x128xf32> -> vector<128x128xf32>
      %16 = arith.addf %11, %15 : vector<128x128xf32>
      %c0_8 = arith.constant 0 : index
      %c0_9 = arith.constant 0 : index
      %17 = vector.load %arg11[%c0_8, %c0_9] : memref<128x128xf32, #tpu.memory_space<vmem>>, vector<128x128xf32>
      tpu.vector_store %arg11[%c0_8, %c0_9], %16 {strides = array<i32>} : memref<128x128xf32, #tpu.memory_space<vmem>>, vector<128x128xf32>,
    } else {
    }
    %c1_i32 = arith.constant 1 : i32
    %8 = arith.cmpi eq, %arg1, %c1_i32 : i32
    %9 = arith.extui %8 : i1 to i32
    %c0_i32_2 = arith.constant 0 : i32
    %10 = arith.cmpi ne, %9, %c0_i32_2 : i32
    scf.if %10 {
      %c0 = arith.constant 0 : index
      %c0_3 = arith.constant 0 : index
      %11 = vector.load %arg11[%c0, %c0_3] : memref<128x128xf32, #tpu.memory_space<vmem>>, vector<128x128xf32>
      %c0_4 = arith.constant 0 : index
      %c0_5 = arith.constant 0 : index
      %12 = vector.load %arg6[%c0_4, %c0_5] : memref<128x128xf32, #tpu.memory_space<vmem>>, vector<128x128xf32>
      %13 = arith.mulf %12, %11 : vector<128x128xf32>
      %14 = tpu.concatenate %11, %13 in 1 : vector<128x128xf32>, vector<128x128xf32> -> vector<128x256xf32>
      %c0_6 = arith.constant 0 : index
      %c0_7 = arith.constant 0 : index
      %15 = vector.load %arg7[%c0_6, %c0_7] : memref<256x256xf32, #tpu.memory_space<vmem>>, vector<256x256xf32>
      %cst = arith.constant dense<0.000000e+00> : vector<128x256xf32>
      %16 = tpu.matmul %14, %15, %cst {dimension_numbers = #tpu.dot_dimension_numbers<[1], [0], [0], [1], [0, 0, 1, 1], [], []>} : vector<128x256xf32>, vector<256x256xf32>, vector<128x256xf32> -> vector<128x256xf32>
      %c0_8 = arith.constant 0 : index
      %c0_9 = arith.constant 0 : index
      %17 = vector.load %arg8[%c0_8, %c0_9] : memref<1x256xf32, #tpu.memory_space<vmem>>, vector<1x256xf32>
      %18 = vector.broadcast %17 : vector<1x256xf32> to vector<128x256xf32>
      %19 = arith.addf %16, %18 : vector<128x256xf32>
      %cst_10 = arith.constant 0.000000e+00 : f32
      %20 = vector.broadcast %cst_10 : f32 to vector<128x256xf32>
      %21 = arith.cmpf oge, %19, %20 : vector<128x256xf32>
      %cst_11 = arith.constant 0.00999999977 : f32
      %22 = vector.broadcast %cst_11 : f32 to vector<128x256xf32>
      %23 = arith.mulf %22, %19 : vector<128x256xf32>
      %24 = arith.select %21, %19, %23 : vector<128x256xi1>, vector<128x256xf32>
      %25 = vector.extract_strided_slice %24 {offsets = [0, 0], sizes = [128, 128], strides = [1, 1]} : vector<128x256xf32> to vector<128x128xf32>
      %26 = vector.extract_strided_slice %24 {offsets = [0, 128], sizes = [128, 128], strides = [1, 1]} : vector<128x256xf32> to vector<128x128xf32>
      %27 = arith.addf %25, %26 : vector<128x128xf32>
      %28 = arith.mulf %27, %27 : vector<128x128xf32>
      %cst_12 = arith.constant dense<0.000000e+00> : vector<128xf32>
      %29 = vector.multi_reduction <add>, %28, %cst_12 [1] : vector<128x128xf32> to vector<128xf32>
      %30 = vector.shape_cast %29 : vector<128xf32> to vector<128x1xf32>
      %cst_13 = arith.constant 1.000000e-24 : f32
      %31 = vector.broadcast %cst_13 : f32 to vector<128x1xf32>
      %32 = arith.maximumf %30, %31 : vector<128x1xf32>
      %33 = math.rsqrt %32 : vector<128x1xf32>
      %34 = vector.broadcast %33 : vector<128x1xf32> to vector<128x128xf32>
      %35 = arith.mulf %27, %34 : vector<128x128xf32>
      %c0_14 = arith.constant 0 : index
      %c0_15 = arith.constant 0 : index
      %36 = vector.load %arg9[%c0_14, %c0_15] : memref<128x128xf32, #tpu.memory_space<vmem>>, vector<128x128xf32>
      tpu.vector_store %arg9[%c0_14, %c0_15], %27 {strides = array<i32>} : memref<128x128xf32, #tpu.memory_space<vmem>>, vector<128x128xf32>,
      %c0_16 = arith.constant 0 : index
      %c0_17 = arith.constant 0 : index
      %37 = vector.load %arg10[%c0_16, %c0_17] : memref<128x128xf32, #tpu.memory_space<vmem>>, vector<128x128xf32>
      tpu.vector_store %arg10[%c0_16, %c0_17], %35 {strides = array<i32>} : memref<128x128xf32, #tpu.memory_space<vmem>>, vector<128x128xf32>,
    } else {
    }
    return
  }
  func.func @transform_0(%arg0: i32, %arg1: i32, %arg2: memref<2xi32, #tpu.memory_space<smem>>, %arg3: memref<4xi32, #tpu.memory_space<smem>>) -> (i32, i32) {
    %c2_i32 = arith.constant 2 : i32
    %0 = arith.muli %arg0, %c2_i32 : i32
    %1 = arith.addi %0, %arg1 : i32
    %2 = arith.index_cast %1 : i32 to index
    %3 = memref.load %arg3[%2] : memref<4xi32, #tpu.memory_space<smem>>
    %c0_i32 = arith.constant 0 : i32
    return %arg0, %3 : i32, i32
  }
  func.func @transform_1(%arg0: i32, %arg1: i32, %arg2: memref<2xi32, #tpu.memory_space<smem>>, %arg3: memref<4xi32, #tpu.memory_space<smem>>) -> (i32, i32) {
    %c2_i32 = arith.constant 2 : i32
    %0 = arith.muli %arg0, %c2_i32 : i32
    %1 = arith.addi %0, %arg1 : i32
    %2 = arith.index_cast %1 : i32 to index
    %3 = memref.load %arg3[%2] : memref<4xi32, #tpu.memory_space<smem>>
    %c0_i32 = arith.constant 0 : i32
    %c0_i32_0 = arith.constant 0 : i32
    return %3, %c0_i32 : i32, i32
  }
  func.func @transform_2(%arg0: i32, %arg1: i32, %arg2: memref<2xi32, #tpu.memory_space<smem>>, %arg3: memref<4xi32, #tpu.memory_space<smem>>) -> (i32, i32) {
    %c0_i32 = arith.constant 0 : i32
    %c0_i32_0 = arith.constant 0 : i32
    return %arg0, %c0_i32 : i32, i32
  }
  func.func @transform_3(%arg0: i32, %arg1: i32, %arg2: memref<2xi32, #tpu.memory_space<smem>>, %arg3: memref<4xi32, #tpu.memory_space<smem>>) -> (i32, i32) {
    %c0_i32 = arith.constant 0 : i32
    %c0_i32_0 = arith.constant 0 : i32
    %c0_i32_1 = arith.constant 0 : i32
    return %c0_i32, %c0_i32_0 : i32, i32
  }
  func.func @transform_4(%arg0: i32, %arg1: i32, %arg2: memref<2xi32, #tpu.memory_space<smem>>, %arg3: memref<4xi32, #tpu.memory_space<smem>>) -> (i32, i32) {
    %c0_i32 = arith.constant 0 : i32
    %c0_i32_0 = arith.constant 0 : i32
    %c0_i32_1 = arith.constant 0 : i32
    return %c0_i32, %c0_i32_0 : i32, i32
  }
  func.func @transform_5(%arg0: i32, %arg1: i32, %arg2: memref<2xi32, #tpu.memory_space<smem>>, %arg3: memref<4xi32, #tpu.memory_space<smem>>) -> (i32, i32) {
    %c0_i32 = arith.constant 0 : i32
    %c0_i32_0 = arith.constant 0 : i32
    return %arg0, %c0_i32 : i32, i32
  }
  func.func @transform_6(%arg0: i32, %arg1: i32, %arg2: memref<2xi32, #tpu.memory_space<smem>>, %arg3: memref<4xi32, #tpu.memory_space<smem>>) -> (i32, i32) {
    %c0_i32 = arith.constant 0 : i32
    %c0_i32_0 = arith.constant 0 : i32
    return %arg0, %c0_i32 : i32, i32
  }
}

</mosaic_0001>

<llo_original>
// kernel: tpu_custom_call.1
$region0: #{tpu_custom_call.1}
  #allocation0 [shape = 'u32[]', space=smem, size = 0x4, offset = 0x4, fixed_abs, tag = 'smem constant byte address 0x4 - core index']
  #allocation1 [shape = 'u32[144,128]{1,0:T(1,128)}', space=vmem, size = 0x12000, scoped, tag = 'internal scratch']
  #allocation2 [shape = 'f32[128,128]{1,0:T(8,128)}', space=vmem, size = 0x10000, scoped, tag = 'scratch operand']
  #allocation3 [shape = 's32[1]{0}', space=sflag, size = 0x4, scoped, tag = 'scoped memory for tpu_custom_call.1']
  #allocation4 [shape = 'u8[512]{0}', space=smem, size = 0x200, scoped, tag = 'prefetched SMEM operand 0']
  #allocation5 [shape = 'u8[512]{0}', space=smem, size = 0x200, scoped, tag = 'prefetched SMEM operand 1']
  %s0 = inlined_call_operand.hbm [shape: s32[2], index: 0, kind: input, shape index: {}]
  %s1 = inlined_call_operand.vmem [shape: s32[4], index: 1, kind: input, shape index: {}]
  %s2 = inlined_call_operand.hbm [shape: bf16[256,256], index: 2, kind: input, shape index: {}]
  %s3 = inlined_call_operand.hbm [shape: f32[256,128], index: 3, kind: input, shape index: {}]
  %s4 = inlined_call_operand.hbm [shape: f32[256,128], index: 4, kind: input, shape index: {}]
  %s5 = inlined_call_operand.hbm [shape: f32[256,256], index: 5, kind: input, shape index: {}]
  %s6 = inlined_call_operand.vmem [shape: f32[1,256], index: 6, kind: input, shape index: {}]
  %s7 = inlined_call_operand.hbm [shape: f32[256,128], index: 7, kind: output, shape index: {0}]
  %s8 = inlined_call_operand.hbm [shape: f32[256,128], index: 8, kind: output, shape index: {1}]
  %9 = xla_tuple %s7, %s8
  %s10 = sld [smem:[#allocation0]]
  $region89: #{tpu_custom_call.1} parent=0
    _
  %s12 = ssub.s32 1, %s10
  %s13 = scalar_select 0, %s12, %s10
  %15 = dma.hbm_to_smem %s0, 16, [#allocation4], [#allocation3]
  %s16 = sshll.u32 %s1, 4
  %s17 = int_to_ptr.vmem [resolvable:$true] %s16
  %19 = dma.vmem_to_smem %s17, 16, [#allocation5], [#allocation3]
  %20 = dma.done [#allocation3], 32
  %21 = sfence
  $region1: #{tpu_custom_call.1} parent=0
    #allocation6 [shape = 'u8[65536]{0}', space=vmem, size = 0x10000, scoped, tag = 'input window, operand 2']
    #allocation7 [shape = 's32[2]{0}', space=sflag, size = 0x8, scoped, tag = 'scoped memory for tpu_custom_call.1']
    #allocation8 [shape = 's32[2]{0}', space=sflag, size = 0x8, scoped, tag = 'scoped memory for tpu_custom_call.1']
    #allocation9 [shape = 'u8[131072]{0}', space=vmem, size = 0x20000, scoped, tag = 'input window, operand 3']
    #allocation10 [shape = 's32[2]{0}', space=sflag, size = 0x8, scoped, tag = 'scoped memory for tpu_custom_call.1']
    #allocation11 [shape = 'u8[131072]{0}', space=vmem, size = 0x20000, scoped, tag = 'input window, operand 4']
    #allocation12 [shape = 'u8[262144]{0}', space=vmem, size = 0x40000, scoped, tag = 'input window, operand 5, single buffered']
    #allocation13 [shape = 's32[1]{0}', space=sflag, size = 0x4, scoped, tag = 'scoped memory for tpu_custom_call.1']
    #allocation14 [shape = 'u8[131072]{0}', space=vmem, size = 0x20000, scoped, tag = 'output window, operand 0']
    #allocation15 [shape = 'u8[131072]{0}', space=vmem, size = 0x20000, scoped, tag = 'output window, operand 1']
    #allocation16 [shape = 's32[2]{0}', space=sflag, size = 0x8, scoped, tag = 'scoped memory for tpu_custom_call.1']
    %22 = vsyncpa [#allocation7], 0
    %s23 = scalar_lea.sflag [#allocation7], 1
    %24 = vsyncpa %s23, 0
    %25 = vsyncpa [#allocation10], 0
    %s26 = scalar_lea.sflag [#allocation10], 1
    %27 = vsyncpa %s26, 0
    %28 = vsyncpa [#allocation13], 0
    %29 = vsyncpa [#allocation8], 0
    %s30 = scalar_lea.sflag [#allocation8], 1
    %31 = vsyncpa %s30, 0
    %32 = vsyncpa [#allocation16], 0
    %s33 = scalar_lea.sflag [#allocation16], 1
    %34 = vsyncpa %s33, 0
    loop: start=0, step=1, limit=6
    $region2: #{tpu_custom_call.1} parent=1 // loop_pre_header
      _
    $region3: #{tpu_custom_call.1} parent=1 // loop_header
      %s36 = sphi 0, %s40
      %p37 = scmp.ge.s32.totalorder %s36, 6
      %s43 = sphi 0, %s55
      %s44 = sphi 0, %s51
      %s45 = sphi 0, %s43
      %s46 = sphi 0, %s44
      %s47 = sphi 0, %s45
      %s48 = sphi 0, %s46
      %s66 = sphi 0, %s68
      %s69 = sphi 0, %s66
      %s70 = sphi 0, %s69
      %s86 = sphi 0, %s70
      %s98 = sphi 0, %s100
      %s101 = sphi 0, %s98
      %s102 = sphi 0, %s101
      %s118 = sphi 0, %s102
      %s124 = sphi 0, %s126
      %s127 = sphi 0, %s124
      %s128 = sphi 0, %s127
      %s144 = sphi 0, %s128
      %s148 = sphi 0, %s148
      %s150 = sphi 0, %s148
      %s151 = sphi 0, %s150
      %s165 = sphi 0, %s151
      %s169 = sphi 0, %s169
      %s171 = sphi 0, %s169
      %s172 = sphi 0, %s171
      %s186 = sphi 0, %s172
      %s192 = sphi 0, %s194
      %s195 = sphi 0, %s192
      %s196 = sphi 0, %s195
      %s212 = sphi 0, %s196
      %s218 = sphi 0, %s220
      %s221 = sphi 0, %s218
      %s222 = sphi 0, %s221
      %s238 = sphi 0, %s222
    $region4: #{tpu_custom_call.1} parent=1 // loop_header_branch
      %39 = sbr.rel (%p37) target = $region8
    $region5: #{tpu_custom_call.1} parent=1 // loop_body
      %s41 = ssub.s32 %s36, 1
      %s42 = ssub.s32 %s36, 2
      %s49 = sadd.s32 1, %s44
      %p50 = scmp.ge.s32.totalorder %s49, 2
      %s51 = scalar_select %p50, 0, %s49
      %s52 = sadd.s32 1, %s43
      %s53 = scalar_select %p50, %s52, %s43
      %p54 = scmp.ge.s32.totalorder %s53, 2
      %s55 = scalar_select %p54, 0, %s53
      %s56 = smul.u32 %s43, 2
      %s57 = sadd.s32 %s56, %s44
      %s58 = sld [smem:[#allocation5 + %s57]]
      %s59 = smul.u32 %s55, 2
      %s60 = sadd.s32 %s59, %s51
      %s61 = sld [smem:[#allocation5 + %s60]]
      %s62 = ssub.s32 %s43, %s55
      %s63 = ssub.s32 %s58, %s61
      %s64 = sor.u32 %s62, %s63
      %p65 = scmp.eq.s32.totalorder %s64, 0
      %s67 = sadd.s32 %s66, 1
      %s68 = scalar_select %p65, %s66, %s67
      %p71 = pneg %p65
      %p72 = scmp.eq.s32.totalorder %s36, 3
      %p73 = por %p71, %p72
      %p74 = scmp.ne.s32.totalorder %s66, %s69
      %p75 = scmp.eq.s32.totalorder %s36, 0
      %p76 = por %p74, %p75
      %p77 = scmp.ne.s32.totalorder %s66, %s69
      %p78 = scmp.eq.s32.totalorder %s41, 3
      %p79 = por %p77, %p78
      %p80 = scmp.ne.s32.totalorder %s69, %s70
      %p81 = scmp.eq.s32.totalorder %s41, 0
      %p82 = por %p80, %p81
      %p83 = scmp.ne.s32.totalorder %s69, %s70
      %p84 = scmp.eq.s32.totalorder %s42, 3
      %p85 = por %p83, %p84
      %p87 = scmp.ne.s32.totalorder %s70, %s86
      %p88 = scmp.eq.s32.totalorder %s42, 0
      %p89 = por %p87, %p88
      %s90 = smul.u32 %s43, 2
      %s91 = sadd.s32 %s90, %s44
      %s92 = sld [smem:[#allocation5 + %s91]]
      %s93 = smul.u32 %s55, 2
      %s94 = sadd.s32 %s93, %s51
      %s95 = sld [smem:[#allocation5 + %s94]]
      %s96 = ssub.s32 %s92, %s95
      %p97 = scmp.eq.s32.totalorder %s96, 0
      %s99 = sadd.s32 %s98, 1
      %s100 = scalar_select %p97, %s98, %s99
      %p103 = pneg %p97
      %p104 = scmp.eq.s32.totalorder %s36, 3
      %p105 = por %p103, %p104
      %p106 = scmp.ne.s32.totalorder %s98, %s101
      %p107 = scmp.eq.s32.totalorder %s36, 0
      %p108 = por %p106, %p107
      %p109 = scmp.ne.s32.totalorder %s98, %s101
      %p110 = scmp.eq.s32.totalorder %s41, 3
      %p111 = por %p109, %p110
      %p112 = scmp.ne.s32.totalorder %s101, %s102
      %p113 = scmp.eq.s32.totalorder %s41, 0
      %p114 = por %p112, %p113
      %p115 = scmp.ne.s32.totalorder %s101, %s102
      %p116 = scmp.eq.s32.totalorder %s42, 3
      %p117 = por %p115, %p116
      %p119 = scmp.ne.s32.totalorder %s102, %s118
      %p120 = scmp.eq.s32.totalorder %s42, 0
      %p121 = por %p119, %p120
      %s122 = ssub.s32 %s43, %s55
      %p123 = scmp.eq.s32.totalorder %s122, 0
      %s125 = sadd.s32 %s124, 1
      %s126 = scalar_select %p123, %s124, %s125
      %p129 = pneg %p123
      %p130 = scmp.eq.s32.totalorder %s36, 3
      %p131 = por %p129, %p130
      %p132 = scmp.ne.s32.totalorder %s124, %s127
      %p133 = scmp.eq.s32.totalorder %s36, 0
      %p134 = por %p132, %p133
      %p135 = scmp.ne.s32.totalorder %s124, %s127
      %p136 = scmp.eq.s32.totalorder %s41, 3
      %p137 = por %p135, %p136
      %p138 = scmp.ne.s32.totalorder %s127, %s128
      %p139 = scmp.eq.s32.totalorder %s41, 0
      %p140 = por %p138, %p139
      %p141 = scmp.ne.s32.totalorder %s127, %s128
      %p142 = scmp.eq.s32.totalorder %s42, 3
      %p143 = por %p141, %p142
      %p145 = scmp.ne.s32.totalorder %s128, %s144
      %p146 = scmp.eq.s32.totalorder %s42, 0
      %p147 = por %p145, %p146
      %s149 = sadd.s32 %s148, 1
      %p152 = scmp.eq.s32.totalorder %s36, 3
      %p153 = scmp.ne.s32.totalorder %s148, %s150
      %p154 = scmp.eq.s32.totalorder %s36, 0
      %p155 = por %p153, %p154
      %p156 = scmp.ne.s32.totalorder %s148, %s150
      %p157 = scmp.eq.s32.totalorder %s41, 3
      %p158 = por %p156, %p157
      %p159 = scmp.ne.s32.totalorder %s150, %s151
      %p160 = scmp.eq.s32.totalorder %s41, 0
      %p161 = por %p159, %p160
      %p162 = scmp.ne.s32.totalorder %s150, %s151
      %p163 = scmp.eq.s32.totalorder %s42, 3
      %p164 = por %p162, %p163
      %p166 = scmp.ne.s32.totalorder %s151, %s165
      %p167 = scmp.eq.s32.totalorder %s42, 0
      %p168 = por %p166, %p167
      %s170 = sadd.s32 %s169, 1
      %p173 = scmp.eq.s32.totalorder %s36, 3
      %p174 = scmp.ne.s32.totalorder %s169, %s171
      %p175 = scmp.eq.s32.totalorder %s36, 0
      %p176 = por %p174, %p175
      %p177 = scmp.ne.s32.totalorder %s169, %s171
      %p178 = scmp.eq.s32.totalorder %s41, 3
      %p179 = por %p177, %p178
      %p180 = scmp.ne.s32.totalorder %s171, %s172
      %p181 = scmp.eq.s32.totalorder %s41, 0
      %p182 = por %p180, %p181
      %p183 = scmp.ne.s32.totalorder %s171, %s172
      %p184 = scmp.eq.s32.totalorder %s42, 3
      %p185 = por %p183, %p184
      %p187 = scmp.ne.s32.totalorder %s172, %s186
      %p188 = scmp.eq.s32.totalorder %s42, 0
      %p189 = por %p187, %p188
      %s190 = ssub.s32 %s43, %s55
      %p191 = scmp.eq.s32.totalorder %s190, 0
      %s193 = sadd.s32 %s192, 1
      %s194 = scalar_select %p191, %s192, %s193
      %p197 = pneg %p191
      %p198 = scmp.eq.s32.totalorder %s36, 3
      %p199 = por %p197, %p198
      %p200 = scmp.ne.s32.totalorder %s192, %s195
      %p201 = scmp.eq.s32.totalorder %s36, 0
      %p202 = por %p200, %p201
      %p203 = scmp.ne.s32.totalorder %s192, %s195
      %p204 = scmp.eq.s32.totalorder %s41, 3
      %p205 = por %p203, %p204
      %p206 = scmp.ne.s32.totalorder %s195, %s196
      %p207 = scmp.eq.s32.totalorder %s41, 0
      %p208 = por %p206, %p207
      %p209 = scmp.ne.s32.totalorder %s195, %s196
      %p210 = scmp.eq.s32.totalorder %s42, 3
      %p211 = por %p209, %p210
      %p213 = scmp.ne.s32.totalorder %s196, %s212
      %p214 = scmp.eq.s32.totalorder %s42, 0
      %p215 = por %p213, %p214
      %s216 = ssub.s32 %s43, %s55
      %p217 = scmp.eq.s32.totalorder %s216, 0
      %s219 = sadd.s32 %s218, 1
      %s220 = scalar_select %p217, %s218, %s219
      %p223 = pneg %p217
      %p224 = scmp.eq.s32.totalorder %s36, 3
      %p225 = por %p223, %p224
      %p226 = scmp.ne.s32.totalorder %s218, %s221
      %p227 = scmp.eq.s32.totalorder %s36, 0
      %p228 = por %p226, %p227
      %p229 = scmp.ne.s32.totalorder %s218, %s221
      %p230 = scmp.eq.s32.totalorder %s41, 3
      %p231 = por %p229, %p230
      %p232 = scmp.ne.s32.totalorder %s221, %s222
      %p233 = scmp.eq.s32.totalorder %s41, 0
      %p234 = por %p232, %p233
      %p235 = scmp.ne.s32.totalorder %s221, %s222
      %p236 = scmp.eq.s32.totalorder %s42, 3
      %p237 = por %p235, %p236
      %p239 = scmp.ne.s32.totalorder %s222, %s238
      %p240 = scmp.eq.s32.totalorder %s42, 0
      %p241 = por %p239, %p240
      %p242 = scmp.le.s32.totalorder 1, %s36
      %p243 = scmp.lt.s32.totalorder %s36, 5
      %p244 = pnand %p242, %p243
      %p245 = pneg %p244
      // Predicated region
      $region9: #{tpu_custom_call.1} parent=5 // pred_check
        _
      $region10: #{tpu_custom_call.1} parent=5 // pred_check_branch
        %247 = sbr.rel (%p244) target = $region12
      $region11: #{tpu_custom_call.1} parent=5 // pred_region
        %s248 = ssub.s32 %s36, 1
        // Predicated region
        $region13: #{tpu_custom_call.1} parent=11 // pred_check
          %p249 = pneg %p161
        $region14: #{tpu_custom_call.1} parent=11 // pred_check_branch
          %251 = sbr.rel (%p249) target = $region16
        $region15: #{tpu_custom_call.1} parent=11 // pred_region
          %s253 = ssub.s32 8192, 8192
          %254 = vsyncadd [#allocation13], %s253
          %s255 = sshll.u32 [#allocation12], 4
          %s256 = int_to_ptr.vmem [resolvable:$true] %s255
          %261 = dma.hbm_to_vmem [thread:$0]  %s5, 8192, %s256, [#allocation13], 256, 256, 16
        $region16: #{tpu_custom_call.1} parent=11 // pred_fallthru
          _
        // Predicated region
        $region17: #{tpu_custom_call.1} parent=11 // pred_check
          %p262 = pneg %p182
        $region18: #{tpu_custom_call.1} parent=11 // pred_check_branch
          %264 = sbr.rel (%p262) target = $region20
        $region19: #{tpu_custom_call.1} parent=11 // pred_region
          _
        $region20: #{tpu_custom_call.1} parent=11 // pred_fallthru
          _
      $region12: #{tpu_custom_call.1} parent=5 // pred_fallthru
        _
      %p265 = scmp.lt.s32.totalorder %s36, 4
      // Predicated region
      $region21: #{tpu_custom_call.1} parent=5 // pred_check
        %p266 = pneg %p265
      $region22: #{tpu_custom_call.1} parent=5 // pred_check_branch
        %268 = sbr.rel (%p266) target = $region24
      $region23: #{tpu_custom_call.1} parent=5 // pred_region
        // Predicated region
        $region25: #{tpu_custom_call.1} parent=23 // pred_check
          %p269 = pneg %p76
        $region26: #{tpu_custom_call.1} parent=23 // pred_check_branch
          %271 = sbr.rel (%p269) target = $region28
        $region27: #{tpu_custom_call.1} parent=23 // pred_region
          %s272 = sand.u32 %s66, 1
          %s273 = scalar_lea.sflag [#allocation7], %s272
          %s274 = sand.u32 %s66, 1
          %s275 = smul.addr %s274, 64
          %s276 = scalar_lea.vmem [#allocation6], %s275
          %s277 = smul.u32 %s43, 2
          %s278 = sadd.s32 %s277, %s44
          %s279 = sld [smem:[#allocation5 + %s278]]
          %s280 = smul.u32 16, %s43
          %s282 = ssub.s32 1024, 1024
          %283 = vsyncadd %s273, %s282
          %s284 = smul.addr %s280, 2
          %s285 = sadd.s32 %s279, %s284
          %s286 = smul.addr %s285, 64
          %s287 = scalar_lea.hbm %s2, %s286
          %s288 = sshll.u32 %s276, 4
          %s289 = int_to_ptr.vmem [resolvable:$true] %s288
          %294 = dma.hbm_to_vmem [thread:$0]  %s287, 1024, %s289, %s273, 128, 64, 4
        $region28: #{tpu_custom_call.1} parent=23 // pred_fallthru
          _
        // Predicated region
        $region29: #{tpu_custom_call.1} parent=23 // pred_check
          %p295 = pneg %p108
        $region30: #{tpu_custom_call.1} parent=23 // pred_check_branch
          %297 = sbr.rel (%p295) target = $region32
        $region31: #{tpu_custom_call.1} parent=23 // pred_region
          %s298 = sand.u32 %s36, 1
          %s299 = scalar_lea.sflag [#allocation10], %s298
          %s300 = sand.u32 %s98, 1
          %s301 = smul.addr %s300, 128
          %s302 = scalar_lea.vmem [#allocation9], %s301
          %s303 = smul.u32 %s43, 2
          %s304 = sadd.s32 %s303, %s44
          %s305 = sld [smem:[#allocation5 + %s304]]
          %s306 = smul.u32 16, %s305
          %s308 = ssub.s32 2048, 2048
          %309 = vsyncadd %s299, %s308
          %s310 = smul.addr %s306, 128
          %s311 = scalar_lea.hbm %s3, %s310
          %s312 = sshll.u32 %s302, 4
          %s313 = int_to_ptr.vmem [resolvable:$true] %s312
          %318 = dma.hbm_to_vmem [thread:$0]  %s311, 2048, %s313, %s299, 128, 128, 8
        $region32: #{tpu_custom_call.1} parent=23 // pred_fallthru
          _
        // Predicated region
        $region33: #{tpu_custom_call.1} parent=23 // pred_check
          %p319 = pneg %p134
        $region34: #{tpu_custom_call.1} parent=23 // pred_check_branch
          %321 = sbr.rel (%p319) target = $region36
        $region35: #{tpu_custom_call.1} parent=23 // pred_region
          %s322 = sand.u32 %s36, 1
          %s323 = scalar_lea.sflag [#allocation10], %s322
          %s324 = sand.u32 %s124, 1
          %s325 = smul.addr %s324, 128
          %s326 = scalar_lea.vmem [#allocation11], %s325
          %s327 = smul.u32 16, %s43
          %s329 = ssub.s32 2048, 2048
          %330 = vsyncadd %s323, %s329
          %s331 = smul.addr %s327, 128
          %s332 = scalar_lea.hbm %s4, %s331
          %s333 = sshll.u32 %s326, 4
          %s334 = int_to_ptr.vmem [resolvable:$true] %s333
          %339 = dma.hbm_to_vmem [thread:$0]  %s332, 2048, %s334, %s323, 128, 128, 8
        $region36: #{tpu_custom_call.1} parent=23 // pred_fallthru
          _
      $region24: #{tpu_custom_call.1} parent=5 // pred_fallthru
        _
      %p340 = scmp.le.s32.totalorder 1, %s36
      %p341 = scmp.lt.s32.totalorder %s36, 5
      %p342 = pnand %p340, %p341
      %p343 = pneg %p342
      // Predicated region
      $region37: #{tpu_custom_call.1} parent=5 // pred_check
        _
      $region38: #{tpu_custom_call.1} parent=5 // pred_check_branch
        %345 = sbr.rel (%p342) target = $region40
      $region39: #{tpu_custom_call.1} parent=5 // pred_region
        %s346 = ssub.s32 %s36, 1
        %s347 = sand.u32 %s69, 1
        %s348 = scalar_lea.sflag [#allocation7], %s347
        %s349 = sand.u32 %s69, 1
        %s350 = smul.addr %s349, 64
        %s351 = scalar_lea.vmem [#allocation6], %s350
        // Predicated region
        $region41: #{tpu_custom_call.1} parent=39 // pred_check
          %p352 = pneg %p82
        $region42: #{tpu_custom_call.1} parent=39 // pred_check_branch
          %354 = sbr.rel (%p352) target = $region44
        $region43: #{tpu_custom_call.1} parent=39 // pred_region
          %355 = dma.done %s348, 1024
        $region44: #{tpu_custom_call.1} parent=39 // pred_fallthru
          _
        %s356 = sand.u32 %s41, 1
        %s357 = scalar_lea.sflag [#allocation10], %s356
        %s358 = sand.u32 %s101, 1
        %s359 = smul.addr %s358, 128
        %s360 = scalar_lea.vmem [#allocation9], %s359
        // Predicated region
        $region45: #{tpu_custom_call.1} parent=39 // pred_check
          %p361 = pneg %p114
        $region46: #{tpu_custom_call.1} parent=39 // pred_check_branch
          %363 = sbr.rel (%p361) target = $region48
        $region47: #{tpu_custom_call.1} parent=39 // pred_region
          %364 = dma.done %s357, 2048
        $region48: #{tpu_custom_call.1} parent=39 // pred_fallthru
          _
        %s365 = sand.u32 %s41, 1
        %s366 = scalar_lea.sflag [#allocation10], %s365
        %s367 = sand.u32 %s127, 1
        %s368 = smul.addr %s367, 128
        %s369 = scalar_lea.vmem [#allocation11], %s368
        // Predicated region
        $region49: #{tpu_custom_call.1} parent=39 // pred_check
          %p370 = pneg %p140
        $region50: #{tpu_custom_call.1} parent=39 // pred_check_branch
          %372 = sbr.rel (%p370) target = $region52
        $region51: #{tpu_custom_call.1} parent=39 // pred_region
          %373 = dma.done %s366, 2048
        $region52: #{tpu_custom_call.1} parent=39 // pred_fallthru
          _
        // Predicated region
        $region53: #{tpu_custom_call.1} parent=39 // pred_check
          %p374 = pneg %p161
        $region54: #{tpu_custom_call.1} parent=39 // pred_check_branch
          %376 = sbr.rel (%p374) target = $region56
        $region55: #{tpu_custom_call.1} parent=39 // pred_region
          %377 = dma.done [#allocation13], 8192
        $region56: #{tpu_custom_call.1} parent=39 // pred_fallthru
          _
        %s378 = sand.u32 %s69, 1
        %s379 = scalar_lea.sflag [#allocation7], %s378
        %s380 = sand.u32 %s69, 1
        %s381 = smul.addr %s380, 64
        %s382 = scalar_lea.vmem [#allocation6], %s381
        %p383 = pneg %p82
        %p384 = pneg %p79
        %s385 = sand.u32 %s41, 1
        %s386 = scalar_lea.sflag [#allocation10], %s385
        %s387 = sand.u32 %s101, 1
        %s388 = smul.addr %s387, 128
        %s389 = scalar_lea.vmem [#allocation9], %s388
        %p390 = pneg %p114
        %p391 = pneg %p111
        %s392 = sand.u32 %s41, 1
        %s393 = scalar_lea.sflag [#allocation10], %s392
        %s394 = sand.u32 %s127, 1
        %s395 = smul.addr %s394, 128
        %s396 = scalar_lea.vmem [#allocation11], %s395
        %p397 = pneg %p140
        %p398 = pneg %p137
        %p399 = pneg %p161
        %p400 = pneg %p158
        %p401 = pneg %p182
        %p402 = pneg %p179
        %p403 = pneg %p208
        %p404 = pneg %p205
        %s405 = sand.u32 %s195, 1
        %s406 = scalar_lea.sflag [#allocation8], %s405
        %s407 = sand.u32 %s195, 1
        %s408 = smul.addr %s407, 128
        %s409 = scalar_lea.vmem [#allocation14], %s408
        %p410 = pneg %p234
        %p411 = pneg %p231
        %s412 = sand.u32 %s221, 1
        %s413 = scalar_lea.sflag [#allocation16], %s412
        %s414 = sand.u32 %s221, 1
        %s415 = smul.addr %s414, 128
        %s416 = scalar_lea.vmem [#allocation15], %s415
        %s417 = smul.u32 %s45, 2
        %s418 = sadd.s32 %s417, %s46
        %s419 = sld [smem:[#allocation5 + %s418]]
        %s420 = smul.u32 16, %s45
        %s421 = smul.u32 %s45, 2
        %s422 = sadd.s32 %s421, %s46
        %s423 = sld [smem:[#allocation5 + %s422]]
        %s424 = smul.u32 16, %s423
        %s425 = smul.u32 16, %s45
        %s426 = smul.u32 16, %s45
        %s427 = smul.u32 16, %s45
        %p429 = scmp.eq.s32.totalorder %s46, 0
        // Predicated region
        $region57: #{tpu_custom_call.1} parent=39 // pred_check
          %p430 = pneg %p429
        $region58: #{tpu_custom_call.1} parent=39 // pred_check_branch
          %432 = sbr.rel (%p430) target = $region60
        $region59: #{tpu_custom_call.1} parent=39 // pred_region
          %433 = vst [vmem:[#allocation2] sm:$0xff] 0.0
          %434 = vst [vmem:[#allocation2 + $0x8] sm:$0xff] 0.0
          %435 = vst [vmem:[#allocation2 + $0x10] sm:$0xff] 0.0
          %436 = vst [vmem:[#allocation2 + $0x18] sm:$0xff] 0.0
          %437 = vst [vmem:[#allocation2 + $0x20] sm:$0xff] 0.0
          %438 = vst [vmem:[#allocation2 + $0x28] sm:$0xff] 0.0
          %439 = vst [vmem:[#allocation2 + $0x30] sm:$0xff] 0.0
          %440 = vst [vmem:[#allocation2 + $0x38] sm:$0xff] 0.0
          %441 = vst [vmem:[#allocation2 + $0x40] sm:$0xff] 0.0
          %442 = vst [vmem:[#allocation2 + $0x48] sm:$0xff] 0.0
          %443 = vst [vmem:[#allocation2 + $0x50] sm:$0xff] 0.0
          %444 = vst [vmem:[#allocation2 + $0x58] sm:$0xff] 0.0
          %445 = vst [vmem:[#allocation2 + $0x60] sm:$0xff] 0.0
          %446 = vst [vmem:[#allocation2 + $0x68] sm:$0xff] 0.0
          %447 = vst [vmem:[#allocation2 + $0x70] sm:$0xff] 0.0
          %448 = vst [vmem:[#allocation2 + $0x78] sm:$0xff] 0.0
        $region60: #{tpu_custom_call.1} parent=39 // pred_fallthru
          _
        %s449 = sld [smem:[#allocation4 + %s45]]
        %p450 = scmp.lt.s32.totalorder %s46, %s449
        // Predicated region
        $region61: #{tpu_custom_call.1} parent=39 // pred_check
          %p451 = pneg %p450
        $region62: #{tpu_custom_call.1} parent=39 // pred_check_branch
          %453 = sbr.rel (%p451) target = $region64
        $region63: #{tpu_custom_call.1} parent=39 // pred_region
          %v454 = vld [vmem:[#allocation2] sm:$0xff]
          %v455 = vld [vmem:[#allocation2 + $0x8] sm:$0xff]
          %v456 = vld [vmem:[#allocation2 + $0x10] sm:$0xff]
          %v457 = vld [vmem:[#allocation2 + $0x18] sm:$0xff]
          %v458 = vld [vmem:[#allocation2 + $0x20] sm:$0xff]
          %v459 = vld [vmem:[#allocation2 + $0x28] sm:$0xff]
          %v460 = vld [vmem:[#allocation2 + $0x30] sm:$0xff]
          %v461 = vld [vmem:[#allocation2 + $0x38] sm:$0xff]
          %v462 = vld [vmem:[#allocation2 + $0x40] sm:$0xff]
          %v463 = vld [vmem:[#allocation2 + $0x48] sm:$0xff]
          %v464 = vld [vmem:[#allocation2 + $0x50] sm:$0xff]
          %v465 = vld [vmem:[#allocation2 + $0x58] sm:$0xff]
          %v466 = vld [vmem:[#allocation2 + $0x60] sm:$0xff]
          %v467 = vld [vmem:[#allocation2 + $0x68] sm:$0xff]
          %v468 = vld [vmem:[#allocation2 + $0x70] sm:$0xff]
          %v469 = vld [vmem:[#allocation2 + $0x78] sm:$0xff]
          %v470 = vld [vmem:[%s351] sm:$0xf]
          %v471 = vld [vmem:[%s351 + $0x4] sm:$0xf]
          %v472 = vld [vmem:[%s351 + $0x8] sm:$0xf]
          %v473 = vld [vmem:[%s351 + $0xc] sm:$0xf]
          %v474 = vld [vmem:[%s351 + $0x10] sm:$0xf]
          %v475 = vld [vmem:[%s351 + $0x14] sm:$0xf]
          %v476 = vld [vmem:[%s351 + $0x18] sm:$0xf]
          %v477 = vld [vmem:[%s351 + $0x1c] sm:$0xf]
          %v478 = vld [vmem:[%s351 + $0x20] sm:$0xf]
          %v479 = vld [vmem:[%s351 + $0x24] sm:$0xf]
          %v480 = vld [vmem:[%s351 + $0x28] sm:$0xf]
          %v481 = vld [vmem:[%s351 + $0x2c] sm:$0xf]
          %v482 = vld [vmem:[%s351 + $0x30] sm:$0xf]
          %v483 = vld [vmem:[%s351 + $0x34] sm:$0xf]
          %v484 = vld [vmem:[%s351 + $0x38] sm:$0xf]
          %v485 = vld [vmem:[%s351 + $0x3c] sm:$0xf]
          %v486 = vld [vmem:[%s360] sm:$0xff]
          %v487 = vld [vmem:[%s360 + $0x8] sm:$0xff]
          %v488 = vld [vmem:[%s360 + $0x10] sm:$0xff]
          %v489 = vld [vmem:[%s360 + $0x18] sm:$0xff]
          %v490 = vld [vmem:[%s360 + $0x20] sm:$0xff]
          %v491 = vld [vmem:[%s360 + $0x28] sm:$0xff]
          %v492 = vld [vmem:[%s360 + $0x30] sm:$0xff]
          %v493 = vld [vmem:[%s360 + $0x38] sm:$0xff]
          %v494 = vld [vmem:[%s360 + $0x40] sm:$0xff]
          %v495 = vld [vmem:[%s360 + $0x48] sm:$0xff]
          %v496 = vld [vmem:[%s360 + $0x50] sm:$0xff]
          %v497 = vld [vmem:[%s360 + $0x58] sm:$0xff]
          %v498 = vld [vmem:[%s360 + $0x60] sm:$0xff]
          %v499 = vld [vmem:[%s360 + $0x68] sm:$0xff]
          %v500 = vld [vmem:[%s360 + $0x70] sm:$0xff]
          %v501 = vld [vmem:[%s360 + $0x78] sm:$0xff]
          %v502 = vpack.c.bf16 %v487, %v486
          %v503 = vpack.c.bf16 %v489, %v488
          %v504 = vpack.c.bf16 %v491, %v490
          %v505 = vpack.c.bf16 %v493, %v492
          %v506 = vpack.c.bf16 %v495, %v494
          %v507 = vpack.c.bf16 %v497, %v496
          %v508 = vpack.c.bf16 %v499, %v498
          %v509 = vpack.c.bf16 %v501, %v500
          %v526 = vunpack.c.l.b16 %v470
          %v527 = vunpack.c.l.b16 %v471
          %v528 = vunpack.c.l.b16 %v472
          %v529 = vunpack.c.l.b16 %v473
          %v530 = vunpack.c.l.b16 %v474
          %v531 = vunpack.c.l.b16 %v475
          %v532 = vunpack.c.l.b16 %v476
          %v533 = vunpack.c.l.b16 %v477
          %v534 = vunpack.c.l.b16 %v478
          %v535 = vunpack.c.l.b16 %v479
          %v536 = vunpack.c.l.b16 %v480
          %v537 = vunpack.c.l.b16 %v481
          %v538 = vunpack.c.l.b16 %v482
          %v539 = vunpack.c.l.b16 %v483
          %v540 = vunpack.c.l.b16 %v484
          %v541 = vunpack.c.l.b16 %v485
          %v542 = vpack.c.b16 %v527, %v526
          %v543 = vpack.c.b16 %v529, %v528
          %v544 = vpack.c.b16 %v531, %v530
          %v545 = vpack.c.b16 %v533, %v532
          %v546 = vpack.c.b16 %v535, %v534
          %v547 = vpack.c.b16 %v537, %v536
          %v548 = vpack.c.b16 %v539, %v538
          %v549 = vpack.c.b16 %v541, %v540
          %558 = vmatprep.subr.bf16.mxu0 0
          %559 = vmatpush1.bf16.msra.mxu0 %v502
          %560 = vmatprep.subr.bf16.mxu0 0
          %561 = vmatpush1.bf16.msra.mxu0 %v503
          %562 = vmatprep.subr.bf16.mxu0 0
          %563 = vmatpush1.bf16.msra.mxu0 %v504
          %564 = vmatprep.subr.bf16.mxu0 0
          %565 = vmatpush1.bf16.msra.mxu0 %v505
          %566 = vmatprep.subr.bf16.mxu0 0
          %567 = vmatpush1.bf16.msra.mxu0 %v506
          %568 = vmatprep.subr.bf16.mxu0 0
          %569 = vmatpush1.bf16.msra.mxu0 %v507
          %570 = vmatprep.subr.bf16.mxu0 0
          %571 = vmatpush1.bf16.msra.mxu0 %v508
          %572 = vmatprep.subr.bf16.mxu0 0
          %573 = vmatpush1.bf16.msra.mxu0 %v509
          %574 = vmatprep.subr.bf16.mxu0 0
          %575 = vmatpush1.bf16.msra.mxu0 0
          %576 = vmatprep.subr.bf16.mxu0 0
          %577 = vmatpush1.bf16.msra.mxu0 0
          %578 = vmatprep.subr.bf16.mxu0 0
          %579 = vmatpush1.bf16.msra.mxu0 0
          %580 = vmatprep.subr.bf16.mxu0 0
          %581 = vmatpush1.bf16.msra.mxu0 0
          %582 = vmatprep.subr.bf16.mxu0 0
          %583 = vmatpush1.bf16.msra.mxu0 0
          %584 = vmatprep.subr.bf16.mxu0 0
          %585 = vmatpush1.bf16.msra.mxu0 0
          %586 = vmatprep.subr.bf16.mxu0 0
          %587 = vmatpush1.bf16.msra.mxu0 0
          %588 = vmatprep.subr.bf16.mxu0 0
          %589 = vmatpush1.bf16.msra.mxu0 0
          %590 = vmatprep.mubr.bf16.mxu0 0
          %591 = vmatmul.mubr.bf16.gmra.mrb[0].mxu0 %v542
          %v592 = vpop.f32.mrb[0].mxu0
          %v593 = vadd.f32 0.0, %v592
          %v594 = vpop.f32.mrb[0].mxu0
          %v595 = vpop.f32.mrb[0].mxu0
          %v596 = vadd.f32 0.0, %v595
          %v597 = vpop.f32.mrb[0].mxu0
          %598 = vmatprep.mubr.bf16.mxu0 0
          %599 = vmatmul.mubr.bf16.gmra.mrb[0].mxu0 %v543
          %v600 = vpop.f32.mrb[0].mxu0
          %v601 = vadd.f32 0.0, %v600
          %v602 = vpop.f32.mrb[0].mxu0
          %v603 = vpop.f32.mrb[0].mxu0
          %v604 = vadd.f32 0.0, %v603
          %v605 = vpop.f32.mrb[0].mxu0
          %606 = vmatprep.mubr.bf16.mxu0 0
          %607 = vmatmul.mubr.bf16.gmra.mrb[0].mxu0 %v544
          %v608 = vpop.f32.mrb[0].mxu0
          %v609 = vadd.f32 0.0, %v608
          %v610 = vpop.f32.mrb[0].mxu0
          %v611 = vpop.f32.mrb[0].mxu0
          %v612 = vadd.f32 0.0, %v611
          %v613 = vpop.f32.mrb[0].mxu0
          %614 = vmatprep.mubr.bf16.mxu0 0
          %615 = vmatmul.mubr.bf16.gmra.mrb[0].mxu0 %v545
          %v616 = vpop.f32.mrb[0].mxu0
          %v617 = vadd.f32 0.0, %v616
          %v618 = vpop.f32.mrb[0].mxu0
          %v619 = vpop.f32.mrb[0].mxu0
          %v620 = vadd.f32 0.0, %v619
          %v621 = vpop.f32.mrb[0].mxu0
          %622 = vmatprep.mubr.bf16.mxu0 0
          %623 = vmatmul.mubr.bf16.gmra.mrb[0].mxu0 %v546
          %v624 = vpop.f32.mrb[0].mxu0
          %v625 = vadd.f32 0.0, %v624
          %v626 = vpop.f32.mrb[0].mxu0
          %v627 = vpop.f32.mrb[0].mxu0
          %v628 = vadd.f32 0.0, %v627
          %v629 = vpop.f32.mrb[0].mxu0
          %630 = vmatprep.mubr.bf16.mxu0 0
          %631 = vmatmul.mubr.bf16.gmra.mrb[0].mxu0 %v547
          %v632 = vpop.f32.mrb[0].mxu0
          %v633 = vadd.f32 0.0, %v632
          %v634 = vpop.f32.mrb[0].mxu0
          %v635 = vpop.f32.mrb[0].mxu0
          %v636 = vadd.f32 0.0, %v635
          %v637 = vpop.f32.mrb[0].mxu0
          %638 = vmatprep.mubr.bf16.mxu0 0
          %639 = vmatmul.mubr.bf16.gmra.mrb[0].mxu0 %v548
          %v640 = vpop.f32.mrb[0].mxu0
          %v641 = vadd.f32 0.0, %v640
          %v642 = vpop.f32.mrb[0].mxu0
          %v643 = vpop.f32.mrb[0].mxu0
          %v644 = vadd.f32 0.0, %v643
          %v645 = vpop.f32.mrb[0].mxu0
          %646 = vmatprep.mubr.bf16.mxu0 0
          %647 = vmatmul.mubr.bf16.gmra.mrb[0].mxu0 %v549
          %v648 = vpop.f32.mrb[0].mxu0
          %v649 = vadd.f32 0.0, %v648
          %v650 = vpop.f32.mrb[0].mxu0
          %v651 = vpop.f32.mrb[0].mxu0
          %v652 = vadd.f32 0.0, %v651
          %v653 = vpop.f32.mrb[0].mxu0
          %654 = vdwg.mxu0
          %v655 = vadd.f32 %v454, %v593
          %v656 = vadd.f32 %v455, %v596
          %v657 = vadd.f32 %v456, %v601
          %v658 = vadd.f32 %v457, %v604
          %v659 = vadd.f32 %v458, %v609
          %v660 = vadd.f32 %v459, %v612
          %v661 = vadd.f32 %v460, %v617
          %v662 = vadd.f32 %v461, %v620
          %v663 = vadd.f32 %v462, %v625
          %v664 = vadd.f32 %v463, %v628
          %v665 = vadd.f32 %v464, %v633
          %v666 = vadd.f32 %v465, %v636
          %v667 = vadd.f32 %v466, %v641
          %v668 = vadd.f32 %v467, %v644
          %v669 = vadd.f32 %v468, %v649
          %v670 = vadd.f32 %v469, %v652
          %671 = vst [vmem:[#allocation2] sm:$0xff] %v655
          %672 = vst [vmem:[#allocation2 + $0x8] sm:$0xff] %v656
          %673 = vst [vmem:[#allocation2 + $0x10] sm:$0xff] %v657
          %674 = vst [vmem:[#allocation2 + $0x18] sm:$0xff] %v658
          %675 = vst [vmem:[#allocation2 + $0x20] sm:$0xff] %v659
          %676 = vst [vmem:[#allocation2 + $0x28] sm:$0xff] %v660
          %677 = vst [vmem:[#allocation2 + $0x30] sm:$0xff] %v661
          %678 = vst [vmem:[#allocation2 + $0x38] sm:$0xff] %v662
          %679 = vst [vmem:[#allocation2 + $0x40] sm:$0xff] %v663
          %680 = vst [vmem:[#allocation2 + $0x48] sm:$0xff] %v664
          %681 = vst [vmem:[#allocation2 + $0x50] sm:$0xff] %v665
          %682 = vst [vmem:[#allocation2 + $0x58] sm:$0xff] %v666
          %683 = vst [vmem:[#allocation2 + $0x60] sm:$0xff] %v667
          %684 = vst [vmem:[#allocation2 + $0x68] sm:$0xff] %v668
          %685 = vst [vmem:[#allocation2 + $0x70] sm:$0xff] %v669
          %686 = vst [vmem:[#allocation2 + $0x78] sm:$0xff] %v670
        $region64: #{tpu_custom_call.1} parent=39 // pred_fallthru
          _
        %p687 = scmp.eq.s32.totalorder %s46, 1
        // Predicated region
        $region65: #{tpu_custom_call.1} parent=39 // pred_check
          %p688 = pneg %p687
        $region66: #{tpu_custom_call.1} parent=39 // pred_check_branch
          %690 = sbr.rel (%p688) target = $region68
        $region67: #{tpu_custom_call.1} parent=39 // pred_region
          %v691 = vld [vmem:[#allocation2] sm:$0xff]
          %v692 = vld [vmem:[#allocation2 + $0x8] sm:$0xff]
          %v693 = vld [vmem:[#allocation2 + $0x10] sm:$0xff]
          %v694 = vld [vmem:[#allocation2 + $0x18] sm:$0xff]
          %v695 = vld [vmem:[#allocation2 + $0x20] sm:$0xff]
          %v696 = vld [vmem:[#allocation2 + $0x28] sm:$0xff]
          %v697 = vld [vmem:[#allocation2 + $0x30] sm:$0xff]
          %v698 = vld [vmem:[#allocation2 + $0x38] sm:$0xff]
          %v699 = vld [vmem:[#allocation2 + $0x40] sm:$0xff]
          %v700 = vld [vmem:[#allocation2 + $0x48] sm:$0xff]
          %v701 = vld [vmem:[#allocation2 + $0x50] sm:$0xff]
          %v702 = vld [vmem:[#allocation2 + $0x58] sm:$0xff]
          %v703 = vld [vmem:[#allocation2 + $0x60] sm:$0xff]
          %v704 = vld [vmem:[#allocation2 + $0x68] sm:$0xff]
          %v705 = vld [vmem:[#allocation2 + $0x70] sm:$0xff]
          %v706 = vld [vmem:[#allocation2 + $0x78] sm:$0xff]
          %v707 = vld [vmem:[%s369] sm:$0xff]
          %v708 = vld [vmem:[%s369 + $0x8] sm:$0xff]
          %v709 = vld [vmem:[%s369 + $0x10] sm:$0xff]
          %v710 = vld [vmem:[%s369 + $0x18] sm:$0xff]
          %v711 = vld [vmem:[%s369 + $0x20] sm:$0xff]
          %v712 = vld [vmem:[%s369 + $0x28] sm:$0xff]
          %v713 = vld [vmem:[%s369 + $0x30] sm:$0xff]
          %v714 = vld [vmem:[%s369 + $0x38] sm:$0xff]
          %v715 = vld [vmem:[%s369 + $0x40] sm:$0xff]
          %v716 = vld [vmem:[%s369 + $0x48] sm:$0xff]
          %v717 = vld [vmem:[%s369 + $0x50] sm:$0xff]
          %v718 = vld [vmem:[%s369 + $0x58] sm:$0xff]
          %v719 = vld [vmem:[%s369 + $0x60] sm:$0xff]
          %v720 = vld [vmem:[%s369 + $0x68] sm:$0xff]
          %v721 = vld [vmem:[%s369 + $0x70] sm:$0xff]
          %v722 = vld [vmem:[%s369 + $0x78] sm:$0xff]
          %v723 = vmul.f32 %v707, %v691
          %v724 = vmul.f32 %v708, %v692
          %v725 = vmul.f32 %v709, %v693
          %v726 = vmul.f32 %v710, %v694
          %v727 = vmul.f32 %v711, %v695
          %v728 = vmul.f32 %v712, %v696
          %v729 = vmul.f32 %v713, %v697
          %v730 = vmul.f32 %v714, %v698
          %v731 = vmul.f32 %v715, %v699
          %v732 = vmul.f32 %v716, %v700
          %v733 = vmul.f32 %v717, %v701
          %v734 = vmul.f32 %v718, %v702
          %v735 = vmul.f32 %v719, %v703
          %v736 = vmul.f32 %v720, %v704
          %v737 = vmul.f32 %v721, %v705
          %v738 = vmul.f32 %v722, %v706
          %v739 = vld [vmem:[#allocation12] sm:$0xff]
          %v740 = vld [vmem:[#allocation12 + $0x8] sm:$0xff]
          %v741 = vld [vmem:[#allocation12 + $0x10] sm:$0xff]
          %v742 = vld [vmem:[#allocation12 + $0x18] sm:$0xff]
          %v743 = vld [vmem:[#allocation12 + $0x20] sm:$0xff]
          %v744 = vld [vmem:[#allocation12 + $0x28] sm:$0xff]
          %v745 = vld [vmem:[#allocation12 + $0x30] sm:$0xff]
          %v746 = vld [vmem:[#allocation12 + $0x38] sm:$0xff]
          %v747 = vld [vmem:[#allocation12 + $0x40] sm:$0xff]
          %v748 = vld [vmem:[#allocation12 + $0x48] sm:$0xff]
          %v749 = vld [vmem:[#allocation12 + $0x50] sm:$0xff]
          %v750 = vld [vmem:[#allocation12 + $0x58] sm:$0xff]
          %v751 = vld [vmem:[#allocation12 + $0x60] sm:$0xff]
          %v752 = vld [vmem:[#allocation12 + $0x68] sm:$0xff]
          %v753 = vld [vmem:[#allocation12 + $0x70] sm:$0xff]
          %v754 = vld [vmem:[#allocation12 + $0x78] sm:$0xff]
          %v755 = vld [vmem:[#allocation12 + $0x80] sm:$0xff]
          %v756 = vld [vmem:[#allocation12 + $0x88] sm:$0xff]
          %v757 = vld [vmem:[#allocation12 + $0x90] sm:$0xff]
          %v758 = vld [vmem:[#allocation12 + $0x98] sm:$0xff]
          %v759 = vld [vmem:[#allocation12 + $0xa0] sm:$0xff]
          %v760 = vld [vmem:[#allocation12 + $0xa8] sm:$0xff]
          %v761 = vld [vmem:[#allocation12 + $0xb0] sm:$0xff]
          %v762 = vld [vmem:[#allocation12 + $0xb8] sm:$0xff]
          %v763 = vld [vmem:[#allocation12 + $0xc0] sm:$0xff]
          %v764 = vld [vmem:[#allocation12 + $0xc8] sm:$0xff]
          %v765 = vld [vmem:[#allocation12 + $0xd0] sm:$0xff]
          %v766 = vld [vmem:[#allocation12 + $0xd8] sm:$0xff]
          %v767 = vld [vmem:[#allocation12 + $0xe0] sm:$0xff]
          %v768 = vld [vmem:[#allocation12 + $0xe8] sm:$0xff]
          %v769 = vld [vmem:[#allocation12 + $0xf0] sm:$0xff]
          %v770 = vld [vmem:[#allocation12 + $0xf8] sm:$0xff]
          %v771 = vld [vmem:[#allocation12 + $0x100] sm:$0xff]
          %v772 = vld [vmem:[#allocation12 + $0x108] sm:$0xff]
          %v773 = vld [vmem:[#allocation12 + $0x110] sm:$0xff]
          %v774 = vld [vmem:[#allocation12 + $0x118] sm:$0xff]
          %v775 = vld [vmem:[#allocation12 + $0x120] sm:$0xff]
          %v776 = vld [vmem:[#allocation12 + $0x128] sm:$0xff]
          %v777 = vld [vmem:[#allocation12 + $0x130] sm:$0xff]
          %v778 = vld [vmem:[#allocation12 + $0x138] sm:$0xff]
          %v779 = vld [vmem:[#allocation12 + $0x140] sm:$0xff]
          %v780 = vld [vmem:[#allocation12 + $0x148] sm:$0xff]
          %v781 = vld [vmem:[#allocation12 + $0x150] sm:$0xff]
          %v782 = vld [vmem:[#allocation12 + $0x158] sm:$0xff]
          %v783 = vld [vmem:[#allocation12 + $0x160] sm:$0xff]
          %v784 = vld [vmem:[#allocation12 + $0x168] sm:$0xff]
          %v785 = vld [vmem:[#allocation12 + $0x170] sm:$0xff]
          %v786 = vld [vmem:[#allocation12 + $0x178] sm:$0xff]
          %v787 = vld [vmem:[#allocation12 + $0x180] sm:$0xff]
          %v788 = vld [vmem:[#allocation12 + $0x188] sm:$0xff]
          %v789 = vld [vmem:[#allocation12 + $0x190] sm:$0xff]
          %v790 = vld [vmem:[#allocation12 + $0x198] sm:$0xff]
          %v791 = vld [vmem:[#allocation12 + $0x1a0] sm:$0xff]
          %v792 = vld [vmem:[#allocation12 + $0x1a8] sm:$0xff]
          %v793 = vld [vmem:[#allocation12 + $0x1b0] sm:$0xff]
          %v794 = vld [vmem:[#allocation12 + $0x1b8] sm:$0xff]
          %v795 = vld [vmem:[#allocation12 + $0x1c0] sm:$0xff]
          %v796 = vld [vmem:[#allocation12 + $0x1c8] sm:$0xff]
          %v797 = vld [vmem:[#allocation12 + $0x1d0] sm:$0xff]
          %v798 = vld [vmem:[#allocation12 + $0x1d8] sm:$0xff]
          %v799 = vld [vmem:[#allocation12 + $0x1e0] sm:$0xff]
          %v800 = vld [vmem:[#allocation12 + $0x1e8] sm:$0xff]
          %v801 = vld [vmem:[#allocation12 + $0x1f0] sm:$0xff]
          %v802 = vld [vmem:[#allocation12 + $0x1f8] sm:$0xff]
          %v803 = vld [vmem:[%s6] sm:$0x3]
          %v805 = vlaneseq
          %v806 = vshrl.u32 %v805, 7
          %v807 = vsub.s32 0, %v806
          %v808 = vrot.slane %v803, %v807
          %v809 = vlaneseq
          %v810 = vshrl.u32 %v809, 7
          %v811 = vsub.s32 1, %v810
          %v812 = vrot.slane %v803, %v811
          %815 = vmatprep.subr.mxu0 %v740
          %816 = vmatpush1.msra.mxu0 %v739
          %817 = vmatprep.subr.mxu0 %v742
          %818 = vmatpush1.msra.mxu0 %v741
          %819 = vmatprep.subr.mxu0 %v744
          %820 = vmatpush1.msra.mxu0 %v743
          %821 = vmatprep.subr.mxu0 %v746
          %822 = vmatpush1.msra.mxu0 %v745
          %823 = vmatprep.subr.mxu0 %v748
          %824 = vmatpush1.msra.mxu0 %v747
          %825 = vmatprep.subr.mxu0 %v750
          %826 = vmatpush1.msra.mxu0 %v749
          %827 = vmatprep.subr.mxu0 %v752
          %828 = vmatpush1.msra.mxu0 %v751
          %829 = vmatprep.subr.mxu0 %v754
          %830 = vmatpush1.msra.mxu0 %v753
          %831 = vmatprep.subr.mxu0 %v756
          %832 = vmatpush1.msra.mxu0 %v755
          %833 = vmatprep.subr.mxu0 %v758
          %834 = vmatpush1.msra.mxu0 %v757
          %835 = vmatprep.subr.mxu0 %v760
          %836 = vmatpush1.msra.mxu0 %v759
          %837 = vmatprep.subr.mxu0 %v762
          %838 = vmatpush1.msra.mxu0 %v761
          %839 = vmatprep.subr.mxu0 %v764
          %840 = vmatpush1.msra.mxu0 %v763
          %841 = vmatprep.subr.mxu0 %v766
          %842 = vmatpush1.msra.mxu0 %v765
          %843 = vmatprep.subr.mxu0 %v768
          %844 = vmatpush1.msra.mxu0 %v767
          %845 = vmatprep.subr.mxu0 %v770
          %846 = vmatpush1.msra.mxu0 %v769
          %847 = vmatprep.subr.mxu0 %v772
          %848 = vmatpush1.msra.mxu0 %v771
          %849 = vmatprep.subr.mxu0 %v774
          %850 = vmatpush1.msra.mxu0 %v773
          %851 = vmatprep.subr.mxu0 %v776
          %852 = vmatpush1.msra.mxu0 %v775
          %853 = vmatprep.subr.mxu0 %v778
          %854 = vmatpush1.msra.mxu0 %v777
          %855 = vmatprep.subr.mxu0 %v780
          %856 = vmatpush1.msra.mxu0 %v779
          %857 = vmatprep.subr.mxu0 %v782
          %858 = vmatpush1.msra.mxu0 %v781
          %859 = vmatprep.subr.mxu0 %v784
          %860 = vmatpush1.msra.mxu0 %v783
          %861 = vmatprep.subr.mxu0 %v786
          %862 = vmatpush1.msra.mxu0 %v785
          %863 = vmatprep.subr.mxu0 %v788
          %864 = vmatpush1.msra.mxu0 %v787
          %865 = vmatprep.subr.mxu0 %v790
          %866 = vmatpush1.msra.mxu0 %v789
          %867 = vmatprep.subr.mxu0 %v792
          %868 = vmatpush1.msra.mxu0 %v791
          %869 = vmatprep.subr.mxu0 %v794
          %870 = vmatpush1.msra.mxu0 %v793
          %871 = vmatprep.subr.mxu0 %v796
          %872 = vmatpush1.msra.mxu0 %v795
          %873 = vmatprep.subr.mxu0 %v798
          %874 = vmatpush1.msra.mxu0 %v797
          %875 = vmatprep.subr.mxu0 %v800
          %876 = vmatpush1.msra.mxu0 %v799
          %877 = vmatprep.subr.mxu0 %v802
          %878 = vmatpush1.msra.mxu0 %v801
          %879 = vmatprep.mubr.f32.mxu0 %v723
          %880 = vmatmul.mubr.f32.gmra.mrb[0].mxu0 %v691
          %v881 = vpop.f32.mrb[0].mxu0
          %v882 = vadd.f32 %v808, %v881
          %v883 = vpop.f32.mrb[0].mxu0
          %v884 = vadd.f32 %v812, %v883
          %885 = vmatprep.mubr.f32.mxu0 %v724
          %886 = vmatmul.mubr.f32.gmra.mrb[0].mxu0 %v692
          %v887 = vpop.f32.mrb[0].mxu0
          %v888 = vadd.f32 %v808, %v887
          %v889 = vpop.f32.mrb[0].mxu0
          %v890 = vadd.f32 %v812, %v889
          %891 = vmatprep.mubr.f32.mxu0 %v725
          %892 = vmatmul.mubr.f32.gmra.mrb[0].mxu0 %v693
          %v893 = vpop.f32.mrb[0].mxu0
          %v894 = vadd.f32 %v808, %v893
          %v895 = vpop.f32.mrb[0].mxu0
          %v896 = vadd.f32 %v812, %v895
          %897 = vmatprep.mubr.f32.mxu0 %v726
          %898 = vmatmul.mubr.f32.gmra.mrb[0].mxu0 %v694
          %v899 = vpop.f32.mrb[0].mxu0
          %v900 = vadd.f32 %v808, %v899
          %v901 = vpop.f32.mrb[0].mxu0
          %v902 = vadd.f32 %v812, %v901
          %903 = vmatprep.mubr.f32.mxu0 %v727
          %904 = vmatmul.mubr.f32.gmra.mrb[0].mxu0 %v695
          %v905 = vpop.f32.mrb[0].mxu0
          %v906 = vadd.f32 %v808, %v905
          %v907 = vpop.f32.mrb[0].mxu0
          %v908 = vadd.f32 %v812, %v907
          %909 = vmatprep.mubr.f32.mxu0 %v728
          %910 = vmatmul.mubr.f32.gmra.mrb[0].mxu0 %v696
          %v911 = vpop.f32.mrb[0].mxu0
          %v912 = vadd.f32 %v808, %v911
          %v913 = vpop.f32.mrb[0].mxu0
          %v914 = vadd.f32 %v812, %v913
          %915 = vmatprep.mubr.f32.mxu0 %v729
          %916 = vmatmul.mubr.f32.gmra.mrb[0].mxu0 %v697
          %v917 = vpop.f32.mrb[0].mxu0
          %v918 = vadd.f32 %v808, %v917
          %v919 = vpop.f32.mrb[0].mxu0
          %v920 = vadd.f32 %v812, %v919
          %921 = vmatprep.mubr.f32.mxu0 %v730
          %922 = vmatmul.mubr.f32.gmra.mrb[0].mxu0 %v698
          %v923 = vpop.f32.mrb[0].mxu0
          %v924 = vadd.f32 %v808, %v923
          %v925 = vpop.f32.mrb[0].mxu0
          %v926 = vadd.f32 %v812, %v925
          %927 = vmatprep.mubr.f32.mxu0 %v731
          %928 = vmatmul.mubr.f32.gmra.mrb[0].mxu0 %v699
          %v929 = vpop.f32.mrb[0].mxu0
          %v930 = vadd.f32 %v808, %v929
          %v931 = vpop.f32.mrb[0].mxu0
          %v932 = vadd.f32 %v812, %v931
          %933 = vmatprep.mubr.f32.mxu0 %v732
          %934 = vmatmul.mubr.f32.gmra.mrb[0].mxu0 %v700
          %v935 = vpop.f32.mrb[0].mxu0
          %v936 = vadd.f32 %v808, %v935
          %v937 = vpop.f32.mrb[0].mxu0
          %v938 = vadd.f32 %v812, %v937
          %939 = vmatprep.mubr.f32.mxu0 %v733
          %940 = vmatmul.mubr.f32.gmra.mrb[0].mxu0 %v701
          %v941 = vpop.f32.mrb[0].mxu0
          %v942 = vadd.f32 %v808, %v941
          %v943 = vpop.f32.mrb[0].mxu0
          %v944 = vadd.f32 %v812, %v943
          %945 = vmatprep.mubr.f32.mxu0 %v734
          %946 = vmatmul.mubr.f32.gmra.mrb[0].mxu0 %v702
          %v947 = vpop.f32.mrb[0].mxu0
          %v948 = vadd.f32 %v808, %v947
          %v949 = vpop.f32.mrb[0].mxu0
          %v950 = vadd.f32 %v812, %v949
          %951 = vmatprep.mubr.f32.mxu0 %v735
          %952 = vmatmul.mubr.f32.gmra.mrb[0].mxu0 %v703
          %v953 = vpop.f32.mrb[0].mxu0
          %v954 = vadd.f32 %v808, %v953
          %v955 = vpop.f32.mrb[0].mxu0
          %v956 = vadd.f32 %v812, %v955
          %957 = vmatprep.mubr.f32.mxu0 %v736
          %958 = vmatmul.mubr.f32.gmra.mrb[0].mxu0 %v704
          %v959 = vpop.f32.mrb[0].mxu0
          %v960 = vadd.f32 %v808, %v959
          %v961 = vpop.f32.mrb[0].mxu0
          %v962 = vadd.f32 %v812, %v961
          %963 = vmatprep.mubr.f32.mxu0 %v737
          %964 = vmatmul.mubr.f32.gmra.mrb[0].mxu0 %v705
          %v965 = vpop.f32.mrb[0].mxu0
          %v966 = vadd.f32 %v808, %v965
          %v967 = vpop.f32.mrb[0].mxu0
          %v968 = vadd.f32 %v812, %v967
          %969 = vmatprep.mubr.f32.mxu0 %v738
          %970 = vmatmul.mubr.f32.gmra.mrb[0].mxu0 %v706
          %v971 = vpop.f32.mrb[0].mxu0
          %v972 = vadd.f32 %v808, %v971
          %v973 = vpop.f32.mrb[0].mxu0
          %v974 = vadd.f32 %v812, %v973
          %975 = vdwg.mxu0
          %vm976 = vcmp.ge.f32.partialorder %v882, 0.0
          %vm977 = vcmp.ge.f32.partialorder %v884, 0.0
          %vm978 = vcmp.ge.f32.partialorder %v888, 0.0
          %vm979 = vcmp.ge.f32.partialorder %v890, 0.0
          %vm980 = vcmp.ge.f32.partialorder %v894, 0.0
          %vm981 = vcmp.ge.f32.partialorder %v896, 0.0
          %vm982 = vcmp.ge.f32.partialorder %v900, 0.0
          %vm983 = vcmp.ge.f32.partialorder %v902, 0.0
          %vm984 = vcmp.ge.f32.partialorder %v906, 0.0
          %vm985 = vcmp.ge.f32.partialorder %v908, 0.0
          %vm986 = vcmp.ge.f32.partialorder %v912, 0.0
          %vm987 = vcmp.ge.f32.partialorder %v914, 0.0
          %vm988 = vcmp.ge.f32.partialorder %v918, 0.0
          %vm989 = vcmp.ge.f32.partialorder %v920, 0.0
          %vm990 = vcmp.ge.f32.partialorder %v924, 0.0
          %vm991 = vcmp.ge.f32.partialorder %v926, 0.0
          %vm992 = vcmp.ge.f32.partialorder %v930, 0.0
          %vm993 = vcmp.ge.f32.partialorder %v932, 0.0
          %vm994 = vcmp.ge.f32.partialorder %v936, 0.0
          %vm995 = vcmp.ge.f32.partialorder %v938, 0.0
          %vm996 = vcmp.ge.f32.partialorder %v942, 0.0
          %vm997 = vcmp.ge.f32.partialorder %v944, 0.0
          %vm998 = vcmp.ge.f32.partialorder %v948, 0.0
          %vm999 = vcmp.ge.f32.partialorder %v950, 0.0
          %vm1000 = vcmp.ge.f32.partialorder %v954, 0.0
          %vm1001 = vcmp.ge.f32.partialorder %v956, 0.0
          %vm1002 = vcmp.ge.f32.partialorder %v960, 0.0
          %vm1003 = vcmp.ge.f32.partialorder %v962, 0.0
          %vm1004 = vcmp.ge.f32.partialorder %v966, 0.0
          %vm1005 = vcmp.ge.f32.partialorder %v968, 0.0
          %vm1006 = vcmp.ge.f32.partialorder %v972, 0.0
          %vm1007 = vcmp.ge.f32.partialorder %v974, 0.0
          %v1008 = vmul.f32 %v882, 0.01
          %v1009 = vmul.f32 %v884, 0.01
          %v1010 = vmul.f32 %v888, 0.01
          %v1011 = vmul.f32 %v890, 0.01
          %v1012 = vmul.f32 %v894, 0.01
          %v1013 = vmul.f32 %v896, 0.01
          %v1014 = vmul.f32 %v900, 0.01
          %v1015 = vmul.f32 %v902, 0.01
          %v1016 = vmul.f32 %v906, 0.01
          %v1017 = vmul.f32 %v908, 0.01
          %v1018 = vmul.f32 %v912, 0.01
          %v1019 = vmul.f32 %v914, 0.01
          %v1020 = vmul.f32 %v918, 0.01
          %v1021 = vmul.f32 %v920, 0.01
          %v1022 = vmul.f32 %v924, 0.01
          %v1023 = vmul.f32 %v926, 0.01
          %v1024 = vmul.f32 %v930, 0.01
          %v1025 = vmul.f32 %v932, 0.01
          %v1026 = vmul.f32 %v936, 0.01
          %v1027 = vmul.f32 %v938, 0.01
          %v1028 = vmul.f32 %v942, 0.01
          %v1029 = vmul.f32 %v944, 0.01
          %v1030 = vmul.f32 %v948, 0.01
          %v1031 = vmul.f32 %v950, 0.01
          %v1032 = vmul.f32 %v954, 0.01
          %v1033 = vmul.f32 %v956, 0.01
          %v1034 = vmul.f32 %v960, 0.01
          %v1035 = vmul.f32 %v962, 0.01
          %v1036 = vmul.f32 %v966, 0.01
          %v1037 = vmul.f32 %v968, 0.01
          %v1038 = vmul.f32 %v972, 0.01
          %v1039 = vmul.f32 %v974, 0.01
          %v1040 = vsel %vm976, %v882, %v1008
          %v1041 = vsel %vm977, %v884, %v1009
          %v1042 = vsel %vm978, %v888, %v1010
          %v1043 = vsel %vm979, %v890, %v1011
          %v1044 = vsel %vm980, %v894, %v1012
          %v1045 = vsel %vm981, %v896, %v1013
          %v1046 = vsel %vm982, %v900, %v1014
          %v1047 = vsel %vm983, %v902, %v1015
          %v1048 = vsel %vm984, %v906, %v1016
          %v1049 = vsel %vm985, %v908, %v1017
          %v1050 = vsel %vm986, %v912, %v1018
          %v1051 = vsel %vm987, %v914, %v1019
          %v1052 = vsel %vm988, %v918, %v1020
          %v1053 = vsel %vm989, %v920, %v1021
          %v1054 = vsel %vm990, %v924, %v1022
          %v1055 = vsel %vm991, %v926, %v1023
          %v1056 = vsel %vm992, %v930, %v1024
          %v1057 = vsel %vm993, %v932, %v1025
          %v1058 = vsel %vm994, %v936, %v1026
          %v1059 = vsel %vm995, %v938, %v1027
          %v1060 = vsel %vm996, %v942, %v1028
          %v1061 = vsel %vm997, %v944, %v1029
          %v1062 = vsel %vm998, %v948, %v1030
          %v1063 = vsel %vm999, %v950, %v1031
          %v1064 = vsel %vm1000, %v954, %v1032
          %v1065 = vsel %vm1001, %v956, %v1033
          %v1066 = vsel %vm1002, %v960, %v1034
          %v1067 = vsel %vm1003, %v962, %v1035
          %v1068 = vsel %vm1004, %v966, %v1036
          %v1069 = vsel %vm1005, %v968, %v1037
          %v1070 = vsel %vm1006, %v972, %v1038
          %v1071 = vsel %vm1007, %v974, %v1039
          %v1072 = vadd.f32 %v1040, %v1041
          %v1073 = vadd.f32 %v1042, %v1043
          %v1074 = vadd.f32 %v1044, %v1045
          %v1075 = vadd.f32 %v1046, %v1047
          %v1076 = vadd.f32 %v1048, %v1049
          %v1077 = vadd.f32 %v1050, %v1051
          %v1078 = vadd.f32 %v1052, %v1053
          %v1079 = vadd.f32 %v1054, %v1055
          %v1080 = vadd.f32 %v1056, %v1057
          %v1081 = vadd.f32 %v1058, %v1059
          %v1082 = vadd.f32 %v1060, %v1061
          %v1083 = vadd.f32 %v1062, %v1063
          %v1084 = vadd.f32 %v1064, %v1065
          %v1085 = vadd.f32 %v1066, %v1067
          %v1086 = vadd.f32 %v1068, %v1069
          %v1087 = vadd.f32 %v1070, %v1071
          %v1088 = vmul.f32 %v1072, %v1072
          %v1089 = vmul.f32 %v1073, %v1073
          %v1090 = vmul.f32 %v1074, %v1074
          %v1091 = vmul.f32 %v1075, %v1075
          %v1092 = vmul.f32 %v1076, %v1076
          %v1093 = vmul.f32 %v1077, %v1077
          %v1094 = vmul.f32 %v1078, %v1078
          %v1095 = vmul.f32 %v1079, %v1079
          %v1096 = vmul.f32 %v1080, %v1080
          %v1097 = vmul.f32 %v1081, %v1081
          %v1098 = vmul.f32 %v1082, %v1082
          %v1099 = vmul.f32 %v1083, %v1083
          %v1100 = vmul.f32 %v1084, %v1084
          %v1101 = vmul.f32 %v1085, %v1085
          %v1102 = vmul.f32 %v1086, %v1086
          %v1103 = vmul.f32 %v1087, %v1087
          %1104 = vadd.xlane.f32.xlu0 %v1088
          %v1105 = vpop.xlane.xlu0 %1104
          %1106 = vadd.xlane.f32.xlu0 %v1089
          %v1107 = vpop.xlane.xlu0 %1106
          %1108 = vadd.xlane.f32.xlu0 %v1090
          %v1109 = vpop.xlane.xlu0 %1108
          %1110 = vadd.xlane.f32.xlu0 %v1091
          %v1111 = vpop.xlane.xlu0 %1110
          %1112 = vadd.xlane.f32.xlu0 %v1092
          %v1113 = vpop.xlane.xlu0 %1112
          %1114 = vadd.xlane.f32.xlu0 %v1093
          %v1115 = vpop.xlane.xlu0 %1114
          %1116 = vadd.xlane.f32.xlu0 %v1094
          %v1117 = vpop.xlane.xlu0 %1116
          %1118 = vadd.xlane.f32.xlu0 %v1095
          %v1119 = vpop.xlane.xlu0 %1118
          %1120 = vadd.xlane.f32.xlu0 %v1096
          %v1121 = vpop.xlane.xlu0 %1120
          %1122 = vadd.xlane.f32.xlu0 %v1097
          %v1123 = vpop.xlane.xlu0 %1122
          %1124 = vadd.xlane.f32.xlu0 %v1098
          %v1125 = vpop.xlane.xlu0 %1124
          %1126 = vadd.xlane.f32.xlu0 %v1099
          %v1127 = vpop.xlane.xlu0 %1126
          %1128 = vadd.xlane.f32.xlu0 %v1100
          %v1129 = vpop.xlane.xlu0 %1128
          %1130 = vadd.xlane.f32.xlu0 %v1101
          %v1131 = vpop.xlane.xlu0 %1130
          %1132 = vadd.xlane.f32.xlu0 %v1102
          %v1133 = vpop.xlane.xlu0 %1132
          %1134 = vadd.xlane.f32.xlu0 %v1103
          %v1135 = vpop.xlane.xlu0 %1134
          %v1136 = vmax.f32 %v1105, 1e-24
          %v1137 = vmax.f32 %v1107, 1e-24
          %v1138 = vmax.f32 %v1109, 1e-24
          %v1139 = vmax.f32 %v1111, 1e-24
          %v1140 = vmax.f32 %v1113, 1e-24
          %v1141 = vmax.f32 %v1115, 1e-24
          %v1142 = vmax.f32 %v1117, 1e-24
          %v1143 = vmax.f32 %v1119, 1e-24
          %v1144 = vmax.f32 %v1121, 1e-24
          %v1145 = vmax.f32 %v1123, 1e-24
          %v1146 = vmax.f32 %v1125, 1e-24
          %v1147 = vmax.f32 %v1127, 1e-24
          %v1148 = vmax.f32 %v1129, 1e-24
          %v1149 = vmax.f32 %v1131, 1e-24
          %v1150 = vmax.f32 %v1133, 1e-24
          %v1151 = vmax.f32 %v1135, 1e-24
          %v1152 = vrsqrt.pop %v1136
          %v1153 = vrsqrt.pop %v1137
          %v1154 = vrsqrt.pop %v1138
          %v1155 = vrsqrt.pop %v1139
          %v1156 = vrsqrt.pop %v1140
          %v1157 = vrsqrt.pop %v1141
          %v1158 = vrsqrt.pop %v1142
          %v1159 = vrsqrt.pop %v1143
          %v1160 = vrsqrt.pop %v1144
          %v1161 = vrsqrt.pop %v1145
          %v1162 = vrsqrt.pop %v1146
          %v1163 = vrsqrt.pop %v1147
          %v1164 = vrsqrt.pop %v1148
          %v1165 = vrsqrt.pop %v1149
          %v1166 = vrsqrt.pop %v1150
          %v1167 = vrsqrt.pop %v1151
          %v1168 = vmul.f32 %v1072, %v1152
          %v1169 = vmul.f32 %v1073, %v1153
          %v1170 = vmul.f32 %v1074, %v1154
          %v1171 = vmul.f32 %v1075, %v1155
          %v1172 = vmul.f32 %v1076, %v1156
          %v1173 = vmul.f32 %v1077, %v1157
          %v1174 = vmul.f32 %v1078, %v1158
          %v1175 = vmul.f32 %v1079, %v1159
          %v1176 = vmul.f32 %v1080, %v1160
          %v1177 = vmul.f32 %v1081, %v1161
          %v1178 = vmul.f32 %v1082, %v1162
          %v1179 = vmul.f32 %v1083, %v1163
          %v1180 = vmul.f32 %v1084, %v1164
          %v1181 = vmul.f32 %v1085, %v1165
          %v1182 = vmul.f32 %v1086, %v1166
          %v1183 = vmul.f32 %v1087, %v1167
          %1184 = vst [vmem:[%s409] sm:$0xff] %v1072
          %1185 = vst [vmem:[%s409 + $0x8] sm:$0xff] %v1073
          %1186 = vst [vmem:[%s409 + $0x10] sm:$0xff] %v1074
          %1187 = vst [vmem:[%s409 + $0x18] sm:$0xff] %v1075
          %1188 = vst [vmem:[%s409 + $0x20] sm:$0xff] %v1076
          %1189 = vst [vmem:[%s409 + $0x28] sm:$0xff] %v1077
          %1190 = vst [vmem:[%s409 + $0x30] sm:$0xff] %v1078
          %1191 = vst [vmem:[%s409 + $0x38] sm:$0xff] %v1079
          %1192 = vst [vmem:[%s409 + $0x40] sm:$0xff] %v1080
          %1193 = vst [vmem:[%s409 + $0x48] sm:$0xff] %v1081
          %1194 = vst [vmem:[%s409 + $0x50] sm:$0xff] %v1082
          %1195 = vst [vmem:[%s409 + $0x58] sm:$0xff] %v1083
          %1196 = vst [vmem:[%s409 + $0x60] sm:$0xff] %v1084
          %1197 = vst [vmem:[%s409 + $0x68] sm:$0xff] %v1085
          %1198 = vst [vmem:[%s409 + $0x70] sm:$0xff] %v1086
          %1199 = vst [vmem:[%s409 + $0x78] sm:$0xff] %v1087
          %1200 = vst [vmem:[%s416] sm:$0xff] %v1168
          %1201 = vst [vmem:[%s416 + $0x8] sm:$0xff] %v1169
          %1202 = vst [vmem:[%s416 + $0x10] sm:$0xff] %v1170
          %1203 = vst [vmem:[%s416 + $0x18] sm:$0xff] %v1171
          %1204 = vst [vmem:[%s416 + $0x20] sm:$0xff] %v1172
          %1205 = vst [vmem:[%s416 + $0x28] sm:$0xff] %v1173
          %1206 = vst [vmem:[%s416 + $0x30] sm:$0xff] %v1174
          %1207 = vst [vmem:[%s416 + $0x38] sm:$0xff] %v1175
          %1208 = vst [vmem:[%s416 + $0x40] sm:$0xff] %v1176
          %1209 = vst [vmem:[%s416 + $0x48] sm:$0xff] %v1177
          %1210 = vst [vmem:[%s416 + $0x50] sm:$0xff] %v1178
          %1211 = vst [vmem:[%s416 + $0x58] sm:$0xff] %v1179
          %1212 = vst [vmem:[%s416 + $0x60] sm:$0xff] %v1180
          %1213 = vst [vmem:[%s416 + $0x68] sm:$0xff] %v1181
          %1214 = vst [vmem:[%s416 + $0x70] sm:$0xff] %v1182
          %1215 = vst [vmem:[%s416 + $0x78] sm:$0xff] %v1183
        $region68: #{tpu_custom_call.1} parent=39 // pred_fallthru
          _
        %s1216 = sand.u32 %s195, 1
        %s1217 = scalar_lea.sflag [#allocation8], %s1216
        %s1218 = sand.u32 %s195, 1
        %s1219 = smul.addr %s1218, 128
        %s1220 = scalar_lea.vmem [#allocation14], %s1219
        %s1221 = sand.u32 %s221, 1
        %s1222 = scalar_lea.sflag [#allocation16], %s1221
        %s1223 = sand.u32 %s221, 1
        %s1224 = smul.addr %s1223, 128
        %s1225 = scalar_lea.vmem [#allocation15], %s1224
        // Predicated region
        $region69: #{tpu_custom_call.1} parent=39 // pred_check
          %p1226 = pneg %p205
        $region70: #{tpu_custom_call.1} parent=39 // pred_check_branch
          %1228 = sbr.rel (%p1226) target = $region72
        $region71: #{tpu_custom_call.1} parent=39 // pred_region
          %s1229 = smul.u32 16, %s45
          %s1231 = ssub.s32 2048, 2048
          %1232 = vsyncadd %s1217, %s1231
          %s1233 = smul.addr %s1229, 128
          %s1234 = scalar_lea.hbm %s7, %s1233
          %s1235 = sshll.u32 %s1220, 4
          %s1236 = int_to_ptr.vmem [resolvable:$true] %s1235
          %1241 = dma.vmem_to_hbm [thread:$0]  %s1236, 2048, %s1234, %s1217, 128, 128, 8
        $region72: #{tpu_custom_call.1} parent=39 // pred_fallthru
          _
        // Predicated region
        $region73: #{tpu_custom_call.1} parent=39 // pred_check
          %p1242 = pneg %p231
        $region74: #{tpu_custom_call.1} parent=39 // pred_check_branch
          %1244 = sbr.rel (%p1242) target = $region76
        $region75: #{tpu_custom_call.1} parent=39 // pred_region
          %s1245 = smul.u32 16, %s45
          %s1247 = ssub.s32 2048, 2048
          %1248 = vsyncadd %s1222, %s1247
          %s1249 = smul.addr %s1245, 128
          %s1250 = scalar_lea.hbm %s8, %s1249
          %s1251 = sshll.u32 %s1225, 4
          %s1252 = int_to_ptr.vmem [resolvable:$true] %s1251
          %1257 = dma.vmem_to_hbm [thread:$0]  %s1252, 2048, %s1250, %s1222, 128, 128, 8
        $region76: #{tpu_custom_call.1} parent=39 // pred_fallthru
          _
      $region40: #{tpu_custom_call.1} parent=5 // pred_fallthru
        _
      %p1258 = scmp.le.s32.totalorder 2, %s36
      // Predicated region
      $region77: #{tpu_custom_call.1} parent=5 // pred_check
        %p1259 = pneg %p1258
      $region78: #{tpu_custom_call.1} parent=5 // pred_check_branch
        %1261 = sbr.rel (%p1259) target = $region80
      $region79: #{tpu_custom_call.1} parent=5 // pred_region
        %s1262 = ssub.s32 %s36, 2
        // Predicated region
        $region81: #{tpu_custom_call.1} parent=79 // pred_check
          %p1263 = pneg %p211
        $region82: #{tpu_custom_call.1} parent=79 // pred_check_branch
          %1265 = sbr.rel (%p1263) target = $region84
        $region83: #{tpu_custom_call.1} parent=79 // pred_region
          %s1266 = sand.u32 %s196, 1
          %s1267 = scalar_lea.sflag [#allocation8], %s1266
          %s1268 = sand.u32 %s196, 1
          %s1269 = smul.addr %s1268, 128
          %s1270 = scalar_lea.vmem [#allocation14], %s1269
          %1271 = dma.done %s1267, 2048
        $region84: #{tpu_custom_call.1} parent=79 // pred_fallthru
          _
        // Predicated region
        $region85: #{tpu_custom_call.1} parent=79 // pred_check
          %p1272 = pneg %p237
        $region86: #{tpu_custom_call.1} parent=79 // pred_check_branch
          %1274 = sbr.rel (%p1272) target = $region88
        $region87: #{tpu_custom_call.1} parent=79 // pred_region
          %s1275 = sand.u32 %s222, 1
          %s1276 = scalar_lea.sflag [#allocation16], %s1275
          %s1277 = sand.u32 %s222, 1
          %s1278 = smul.addr %s1277, 128
          %s1279 = scalar_lea.vmem [#allocation15], %s1278
          %1280 = dma.done %s1276, 2048
        $region88: #{tpu_custom_call.1} parent=79 // pred_fallthru
          _
      $region80: #{tpu_custom_call.1} parent=5 // pred_fallthru
        _
    $region6: #{tpu_custom_call.1} parent=1 // loop_footer
      %s40 = sadd.s32 1, %s36
    $region7: #{tpu_custom_call.1} parent=1 // loop_footer_branch
      %35 = sbr.rel target = $region3
    $region8: #{tpu_custom_call.1} parent=1 // loop_exit
      _
    %1281 = vsyncpa [#allocation7], 1
    %s1282 = scalar_lea.sflag [#allocation7], 1
    %1283 = vsyncpa %s1282, 1
    %1284 = vsyncpa [#allocation10], 1
    %s1285 = scalar_lea.sflag [#allocation10], 1
    %1286 = vsyncpa %s1285, 1
    %1287 = vsyncpa [#allocation13], 1
    %1288 = vsyncpa [#allocation8], 1
    %s1289 = scalar_lea.sflag [#allocation8], 1
    %1290 = vsyncpa %s1289, 1
    %1291 = vsyncpa [#allocation16], 1
    %s1292 = scalar_lea.sflag [#allocation16], 1
    %1293 = vsyncpa %s1292, 1

</llo_original>
